<compile_context>
chip_gen: v6e
topology: v6e:2x2x1
jax: 0.10.0
libtpu: 0.0.40
codegen_flags: <defaults>
</compile_context>

<pallas_src>
import functools
from typing import NamedTuple, Tuple

import numpy as np
import jax
import jax.numpy as jnp
from jax.experimental import pallas as pl
from jax.experimental.pallas import tpu as pltpu

LEAKY_SLOPE = 0.2
MLP_PAD = 128          # lane width type_define activations are padded to


def _align8(n: int) -> int:
    return (n + 7) // 8 * 8


class Config(NamedTuple):
    role_types: int
    gru: int
    n_heads: int
    mlp_hiddens: Tuple[int, ...]    # len == mlp_layer
    type_order: Tuple[int, ...]     # iteration order of H_types.keys()
    type_counts: Tuple[int, ...]    # agents per type, same order


# ----------------------------------------------------------------------------
# Packed-buffer layouts (row offsets 8-aligned -> every in-kernel view is a
# sublane-aligned static slice).
# ----------------------------------------------------------------------------
def _layout(items):
    off, lay = 0, {}
    for name, rows in items:
        lay[name] = (off, rows)
        off = _align8(off + rows)
    return lay, off


def _p32_layout(cfg: Config):
    g, rt = cfg.gru, cfg.role_types
    return _layout([
        ("w_self", g), ("b_self", 1),
        ("w_comb", rt * g), ("b_comb", rt),
        ("w_mers_h", g),
    ])


def _p128_layout(cfg: Config):
    g, hnh = cfg.gru, cfg.n_heads * cfg.gru
    items = [("a_rep", hnh), ("t_fold_rep", hnh), ("w_mlp0_amb", g), ("b_mlp0", 1)]
    for i in range(1, len(cfg.mlp_hiddens)):
        items += [(f"w_mlp{i}", MLP_PAD), (f"b_mlp{i}", 1)]
    items += [("w_out", MLP_PAD), ("b_out", 1)]
    return _layout(items)


# ----------------------------------------------------------------------------
# Parameters (PyTorch-Linear-style uniform init; weights stored [in, out]).
# ----------------------------------------------------------------------------
def init_params(key, cfg: Config):
    g, rt = cfg.gru, cfg.role_types
    hnh = cfg.n_heads * g
    keys = iter(jax.random.split(key, 64))

    def dense(fan_in, fan_out):
        k1, k2 = jax.random.split(next(keys))
        bound = 1.0 / (fan_in ** 0.5)
        w = jax.random.uniform(k1, (fan_in, fan_out), jnp.float32, -bound, bound)
        b = jax.random.uniform(k2, (1, fan_out), jnp.float32, -bound, bound)
        return w, b

    p = {}
    p["w_self"], p["b_self"] = dense(g, g)                       # type_self_mlp
    wt, bt = zip(*[dense(g, g) for _ in range(rt)])              # type_trans_mlp
    p["w_trans"] = jnp.stack(wt)                                 # [rt, g, g]
    p["b_trans"] = jnp.concatenate(bt, axis=0)                   # [rt, g]
    p["w_mers"], p["b_mers"] = dense(2 * g, g)                   # type_mersion_mlp
    # GATv2 (is_concat=False -> n_hidden = gru): bias-free l/r linears,
    # single head-shared attention vector.
    bound = 1.0 / (g ** 0.5)
    p["gat_wl"] = jax.random.uniform(next(keys), (g, hnh), jnp.float32, -bound, bound)
    p["gat_wr"] = jax.random.uniform(next(keys), (g, hnh), jnp.float32, -bound, bound)
    p["gat_a"] = jax.random.uniform(next(keys), (1, g), jnp.float32, -bound, bound)
    # type_define_mlp
    p["mlp0_w"], p["mlp0_b"] = dense(2 * g, cfg.mlp_hiddens[0])
    rest, in_f = [], cfg.mlp_hiddens[0]
    for h in cfg.mlp_hiddens[1:]:
        rest.append(dense(in_f, h))
        in_f = h
    p["mlp_rest"] = rest
    p["w_out"], p["b_out"] = dense(in_f, rt)
    return p


# ----------------------------------------------------------------------------
# One-time packing / constant folding (hoisted out of the per-call trace).
# ----------------------------------------------------------------------------
def pack_params(params, cfg: Config):
    g, rt, H = cfg.gru, cfg.role_types, cfg.n_heads
    hnh = H * g
    f32 = jnp.float32
    assert hnh == MLP_PAD, "head-packed lane width (n_heads * gru) must be 128"
    assert all(h <= MLP_PAD for h in cfg.mlp_hiddens) and rt <= MLP_PAD
    assert len(cfg.type_order) == len(cfg.type_counts)

    # Fold type_trans + tmp-half of type_mersion (+ biases) into w_comb/b_comb.
    w_mh, w_mt = params["w_mers"][:g], params["w_mers"][g:]
    w_comb = jnp.einsum("tij,jk->tik", params["w_trans"], w_mt)       # [rt, g, g]
    b_comb = params["b_trans"] @ w_mt + params["b_mers"]              # [rt, g]

    # GAT constants: head-replicated attention matrix; head-mean fold
    # pre-multiplied into the "repeat(hidden_2)" half of type_define layer 0.
    a = params["gat_a"][0]                                            # [g]
    a_rep = jnp.kron(jnp.eye(H, dtype=f32), jnp.outer(a, jnp.ones((g,), f32)))
    w0_amb, w0_rep = params["mlp0_w"][:g], params["mlp0_w"][g:]
    t_fold_rep = jnp.tile(w0_rep, (H, 1)) / H                         # [hnh, h0]

    def fill(buf, lay, name, arr):
        off, rows = lay[name]
        assert arr.shape[0] <= rows
        return buf.at[off:off + arr.shape[0], :arr.shape[1]].set(arr.astype(f32))

    lay32, rows32 = _p32_layout(cfg)
    p32 = jnp.zeros((rows32, g), f32)
    p32 = fill(p32, lay32, "w_self", params["w_self"])
    p32 = fill(p32, lay32, "b_self", params["b_self"])
    p32 = fill(p32, lay32, "w_comb", w_comb.reshape(rt * g, g))
    p32 = fill(p32, lay32, "b_comb", b_comb)
    p32 = fill(p32, lay32, "w_mers_h", w_mh)

    lay128, rows128 = _p128_layout(cfg)
    p128 = jnp.zeros((rows128, MLP_PAD), f32)
    p128 = fill(p128, lay128, "a_rep", a_rep)
    p128 = fill(p128, lay128, "t_fold_rep", t_fold_rep)
    p128 = fill(p128, lay128, "w_mlp0_amb", w0_amb)
    p128 = fill(p128, lay128, "b_mlp0", params["mlp0_b"])
    for i in range(1, len(cfg.mlp_hiddens)):
        w, b = params["mlp_rest"][i - 1]
        p128 = fill(p128, lay128, f"w_mlp{i}", w)
        p128 = fill(p128, lay128, f"b_mlp{i}", b)
    p128 = fill(p128, lay128, "w_out", params["w_out"])
    p128 = fill(p128, lay128, "b_out", params["b_out"])

    # Fused GATv2 l|r projection (one 256-wide matmul instead of two).
    p256 = jnp.concatenate([params["gat_wl"], params["gat_wr"]], axis=1)

    # Per-type averaging matrix (mean over agents folded into one matmul).
    nt, n_agents = len(cfg.type_counts), sum(cfg.type_counts)
    avg = np.zeros((nt, n_agents), np.float32)
    col = 0
    for r, c in enumerate(cfg.type_counts):
        assert c > 0, "each type needs at least one agent"
        avg[r, col:col + c] = 1.0 / c
        col += c

    return {"p32": p32, "p128": p128, "p256": p256, "avg": jnp.asarray(avg)}


# ----------------------------------------------------------------------------
# Fused kernel: whole MlroleNode forward in one VMEM-resident body.
# ----------------------------------------------------------------------------
def _mlrole_kernel(data_ref, avg_ref, p32_ref, p128_ref, p256_ref, o_ref,
                   *, cfg: Config, lay32, lay128, n_amb, n_agents):
    f32 = jnp.float32
    g, H, rt = cfg.gru, cfg.n_heads, cfg.role_types
    hnh = H * g

    def leaky(y):
        return jnp.where(y >= 0, y, LEAKY_SLOPE * y)

    def dot(a, b):
        return jnp.dot(a, b, preferred_element_type=f32)

    def p32(name):
        off, rows = lay32[name]
        return p32_ref[off:off + rows, :]

    def p128(name):
        off, rows = lay128[name]
        return p128_ref[off:off + rows, :]

    # Runtime data (one packed buffer: hidden / ambiguous / agents, 8-aligned).
    amb_off = 8
    ag_off = amb_off + _align8(n_amb)
    hidden = data_ref[0:1, :]                          # [1, g]
    amb = data_ref[amb_off:amb_off + n_amb, :]         # [n_amb, g]
    agents = data_ref[ag_off:ag_off + n_agents, :]     # [n_agents, g]

    # --- 1) type_self_mlp (no activation) ------------------------------------
    h1 = dot(hidden, p32("w_self")) + p32("b_self")

    # --- 2) per-type fusion ---------------------------------------------------
    # c[t] = (mean_t @ W_trans[t] + b_trans[t]) @ W_mers[:, tmp-half] + b_mers
    # is independent of h1 (hoisted + weight-folded at pack time); the serial
    # chain is one matmul per step: h1 = leaky(h1 @ W_mers[:, h-half] + c[t]).
    means = dot(avg_ref[...], agents)                  # [n_types, g]
    wc_off, _ = lay32["w_comb"]
    b_comb = p32("b_comb")                             # [rt, g]
    c = [dot(means[s:s + 1, :], p32_ref[wc_off + t * g: wc_off + (t + 1) * g, :])
         + b_comb[t:t + 1, :]
         for s, t in enumerate(cfg.type_order)]
    w_mh = p32("w_mers_h")
    for s in range(len(cfg.type_order)):
        h1 = leaky(dot(h1, w_mh) + c[s])

    # --- 3) GATv2 over nodes {h1, ambiguous...}; only node 0 is consumed -----
    w_glr = p256_ref[...]                              # [g, 2*hnh] fused l|r
    g_self = dot(h1, w_glr)                            # [1, 2*hnh]
    g_amb = dot(amb, w_glr)                            # [n_amb, 2*hnh]
    gl_self, gr_self = g_self[:, :hnh], g_self[:, hnh:]
    gl_amb, gr_amb = g_amb[:, :hnh], g_amb[:, hnh:]

    a_rep = p128("a_rep")                              # head-replicated attn vec
    e_self = dot(leaky(gl_self + gr_self), a_rep)      # [1, hnh]
    e_amb = dot(leaky(gl_amb + gr_self), a_rep)        # [n_amb, hnh]

    # softmax over neighbours (all-ones adjacency -> no mask; dropout = id)
    m = jnp.maximum(e_self, jnp.max(e_amb, axis=0, keepdims=True))
    p_s = jnp.exp(e_self - m)
    p_a = jnp.exp(e_amb - m)
    inv = pl.reciprocal(p_s + jnp.sum(p_a, axis=0, keepdims=True), approx=True)
    # aggregate g_r (as the reference does); reciprocal factored out
    v = (p_s * gr_self + jnp.sum(p_a * gr_amb, axis=0, keepdims=True)) * inv   # [1, hnh]

    # --- 4) type_define_mlp head ---------------------------------------------
    # Head-mean + repeat + the "hidden_2" half of layer 0 are pre-folded into
    # t_fold_rep; the ambiguous half uses the pre-split layer-0 weight.
    x = leaky(dot(amb, p128("w_mlp0_amb")) + dot(v, p128("t_fold_rep")) + p128("b_mlp0"))
    for i in range(1, len(cfg.mlp_hiddens)):
        x = leaky(dot(x, p128(f"w_mlp{i}")) + p128(f"b_mlp{i}"))
    y = dot(x, p128("w_out")) + p128("b_out")          # [n_amb, 128]; cols >= rt are 0

    # numerically stable sigmoid with one shared reciprocal
    z = jnp.exp(-jnp.abs(y))
    r = 1.0 / (1.0 + z)
    o_ref[...] = jnp.where(y >= 0, r, z * r)[:, :rt]


# ----------------------------------------------------------------------------
# Wrapper: one pallas_call, 5 whole-array VMEM-resident inputs.
# ----------------------------------------------------------------------------
def mlrole_forward(packed, hidden, ambiguous, agents_all, *, cfg: Config):
    """agents_all: all agents concatenated in cfg.type_order order."""
    g = cfg.gru
    n_amb = ambiguous.shape[0]
    n_agents = agents_all.shape[0]
    assert n_agents == sum(cfg.type_counts)
    lay32, _ = _p32_layout(cfg)
    lay128, _ = _p128_layout(cfg)

    # Stack the three runtime tensors into one sublane-aligned buffer so the
    # kernel sees a single live data input (one DMA).
    amb_off = 8
    ag_off = amb_off + _align8(n_amb)
    rows = ag_off + _align8(n_agents)
    data = jnp.zeros((rows, g), jnp.float32)
    data = data.at[0:1, :].set(hidden)
    data = data.at[amb_off:amb_off + n_amb, :].set(ambiguous)
    data = data.at[ag_off:ag_off + n_agents, :].set(agents_all)

    kernel = functools.partial(_mlrole_kernel, cfg=cfg, lay32=lay32,
                               lay128=lay128, n_amb=n_amb, n_agents=n_agents)
    vmem = pltpu.MemorySpace.VMEM
    return pl.pallas_call(
        kernel,
        out_shape=jax.ShapeDtypeStruct((n_amb, cfg.role_types), jnp.float32),
        in_specs=[pl.BlockSpec(memory_space=vmem)] * 5,
        out_specs=pl.BlockSpec(memory_space=vmem),
    )(data, packed["avg"], packed["p32"], packed["p128"], packed["p256"])


if __name__ == "__main__":
    role_types = 3
    gru_hiddens = 32
    n_heads = 4
    mlp_hiddens = (64, 128)          # mlp_layer = 2
    n_ambiguous = 4
    n_agents_per_type = (2, 1, 3)

    cfg = Config(role_types=role_types, gru=gru_hiddens, n_heads=n_heads,
                 mlp_hiddens=mlp_hiddens,
                 type_order=tuple(range(role_types)),
                 type_counts=n_agents_per_type)

    key = jax.random.PRNGKey(0)
    kp, kh, ka, *kt = jax.random.split(key, 3 + role_types)

    params = init_params(kp, cfg)
    packed = pack_params(params, cfg)        # one-time packing / constant folding

    hidden = jax.random.normal(kh, (1, gru_hiddens), jnp.float32)
    ambiguous = jax.random.normal(ka, (n_ambiguous, gru_hiddens), jnp.float32)
    types = {}
    for t in range(role_types):
        aks = jax.random.split(kt[t], n_agents_per_type[t])
        types[t] = [jax.random.normal(aks[i], (1, gru_hiddens), jnp.float32)
                    for i in range(n_agents_per_type[t])]
    agents_all = jnp.concatenate([a for t in cfg.type_order for a in types[t]], axis=0)

    fwd = jax.jit(mlrole_forward, static_argnames=("cfg",))
    out = fwd(packed, hidden, ambiguous, agents_all, cfg=cfg)
    out = jax.block_until_ready(out)
    assert out.shape == (n_ambiguous, role_types)
    assert bool(jnp.all((out >= 0.0) & (out <= 1.0)))
    print("KERNEL_OK")
</pallas_src>

<mosaic_0001>
module attributes {stable_mosaic.version = 11 : i64} {
  func.func @_mlrole_kernel(%arg0: memref<24x32xf32, #tpu.memory_space<vmem>>, %arg1: memref<3x6xf32, #tpu.memory_space<vmem>>, %arg2: memref<176x32xf32, #tpu.memory_space<vmem>>, %arg3: memref<568x128xf32, #tpu.memory_space<vmem>>, %arg4: memref<32x256xf32, #tpu.memory_space<vmem>>, %arg5: memref<4x3xf32, #tpu.memory_space<vmem>>) attributes {dimension_semantics = [], scalar_prefetch = 0 : i64, scratch_operands = 0 : i64, tpu.core_type = #tpu.core_type<tc>} {
    %c0 = arith.constant 0 : index
    %c0_0 = arith.constant 0 : index
    %0 = vector.load %arg0[%c0, %c0_0] : memref<24x32xf32, #tpu.memory_space<vmem>>, vector<1x32xf32>
    %c8 = arith.constant 8 : index
    %c0_1 = arith.constant 0 : index
    %1 = vector.load %arg0[%c8, %c0_1] : memref<24x32xf32, #tpu.memory_space<vmem>>, vector<4x32xf32>
    %c16 = arith.constant 16 : index
    %c0_2 = arith.constant 0 : index
    %2 = vector.load %arg0[%c16, %c0_2] : memref<24x32xf32, #tpu.memory_space<vmem>>, vector<6x32xf32>
    %c0_3 = arith.constant 0 : index
    %c0_4 = arith.constant 0 : index
    %3 = vector.load %arg2[%c0_3, %c0_4] : memref<176x32xf32, #tpu.memory_space<vmem>>, vector<32x32xf32>
    %cst = arith.constant dense<0.000000e+00> : vector<1x32xf32>
    %4 = tpu.matmul %0, %3, %cst {dimension_numbers = #tpu.dot_dimension_numbers<[1], [0], [0], [1], [0, 0, 1, 1], [], []>} : vector<1x32xf32>, vector<32x32xf32>, vector<1x32xf32> -> vector<1x32xf32>
    %c32 = arith.constant 32 : index
    %c0_5 = arith.constant 0 : index
    %5 = vector.load %arg2[%c32, %c0_5] : memref<176x32xf32, #tpu.memory_space<vmem>>, vector<1x32xf32>
    %6 = arith.addf %4, %5 : vector<1x32xf32>
    %c0_6 = arith.constant 0 : index
    %c0_7 = arith.constant 0 : index
    %7 = vector.load %arg1[%c0_6, %c0_7] : memref<3x6xf32, #tpu.memory_space<vmem>>, vector<3x6xf32>
    %cst_8 = arith.constant dense<0.000000e+00> : vector<3x32xf32>
    %8 = tpu.matmul %7, %2, %cst_8 {dimension_numbers = #tpu.dot_dimension_numbers<[1], [0], [0], [1], [0, 0, 1, 1], [], []>} : vector<3x6xf32>, vector<6x32xf32>, vector<3x32xf32> -> vector<3x32xf32>
    %c136 = arith.constant 136 : index
    %c0_9 = arith.constant 0 : index
    %9 = vector.load %arg2[%c136, %c0_9] : memref<176x32xf32, #tpu.memory_space<vmem>>, vector<3x32xf32>
    %10 = vector.extract_strided_slice %8 {offsets = [0, 0], sizes = [1, 32], strides = [1, 1]} : vector<3x32xf32> to vector<1x32xf32>
    %c40 = arith.constant 40 : index
    %c0_10 = arith.constant 0 : index
    %11 = vector.load %arg2[%c40, %c0_10] : memref<176x32xf32, #tpu.memory_space<vmem>>, vector<32x32xf32>
    %cst_11 = arith.constant dense<0.000000e+00> : vector<1x32xf32>
    %12 = tpu.matmul %10, %11, %cst_11 {dimension_numbers = #tpu.dot_dimension_numbers<[1], [0], [0], [1], [0, 0, 1, 1], [], []>} : vector<1x32xf32>, vector<32x32xf32>, vector<1x32xf32> -> vector<1x32xf32>
    %13 = vector.extract_strided_slice %9 {offsets = [0, 0], sizes = [1, 32], strides = [1, 1]} : vector<3x32xf32> to vector<1x32xf32>
    %14 = arith.addf %12, %13 : vector<1x32xf32>
    %15 = vector.extract_strided_slice %8 {offsets = [1, 0], sizes = [1, 32], strides = [1, 1]} : vector<3x32xf32> to vector<1x32xf32>
    %c72 = arith.constant 72 : index
    %c0_12 = arith.constant 0 : index
    %16 = vector.load %arg2[%c72, %c0_12] : memref<176x32xf32, #tpu.memory_space<vmem>>, vector<32x32xf32>
    %cst_13 = arith.constant dense<0.000000e+00> : vector<1x32xf32>
    %17 = tpu.matmul %15, %16, %cst_13 {dimension_numbers = #tpu.dot_dimension_numbers<[1], [0], [0], [1], [0, 0, 1, 1], [], []>} : vector<1x32xf32>, vector<32x32xf32>, vector<1x32xf32> -> vector<1x32xf32>
    %18 = vector.extract_strided_slice %9 {offsets = [1, 0], sizes = [1, 32], strides = [1, 1]} : vector<3x32xf32> to vector<1x32xf32>
    %19 = arith.addf %17, %18 : vector<1x32xf32>
    %20 = vector.extract_strided_slice %8 {offsets = [2, 0], sizes = [1, 32], strides = [1, 1]} : vector<3x32xf32> to vector<1x32xf32>
    %c104 = arith.constant 104 : index
    %c0_14 = arith.constant 0 : index
    %21 = vector.load %arg2[%c104, %c0_14] : memref<176x32xf32, #tpu.memory_space<vmem>>, vector<32x32xf32>
    %cst_15 = arith.constant dense<0.000000e+00> : vector<1x32xf32>
    %22 = tpu.matmul %20, %21, %cst_15 {dimension_numbers = #tpu.dot_dimension_numbers<[1], [0], [0], [1], [0, 0, 1, 1], [], []>} : vector<1x32xf32>, vector<32x32xf32>, vector<1x32xf32> -> vector<1x32xf32>
    %23 = vector.extract_strided_slice %9 {offsets = [2, 0], sizes = [1, 32], strides = [1, 1]} : vector<3x32xf32> to vector<1x32xf32>
    %24 = arith.addf %22, %23 : vector<1x32xf32>
    %c144 = arith.constant 144 : index
    %c0_16 = arith.constant 0 : index
    %25 = vector.load %arg2[%c144, %c0_16] : memref<176x32xf32, #tpu.memory_space<vmem>>, vector<32x32xf32>
    %cst_17 = arith.constant dense<0.000000e+00> : vector<1x32xf32>
    %26 = tpu.matmul %6, %25, %cst_17 {dimension_numbers = #tpu.dot_dimension_numbers<[1], [0], [0], [1], [0, 0, 1, 1], [], []>} : vector<1x32xf32>, vector<32x32xf32>, vector<1x32xf32> -> vector<1x32xf32>
    %27 = arith.addf %26, %14 : vector<1x32xf32>
    %cst_18 = arith.constant 0.000000e+00 : f32
    %28 = vector.broadcast %cst_18 : f32 to vector<1x32xf32>
    %29 = arith.cmpf oge, %27, %28 : vector<1x32xf32>
    %cst_19 = arith.constant 2.000000e-01 : f32
    %30 = vector.broadcast %cst_19 : f32 to vector<1x32xf32>
    %31 = arith.mulf %30, %27 : vector<1x32xf32>
    %32 = arith.select %29, %27, %31 : vector<1x32xi1>, vector<1x32xf32>
    %cst_20 = arith.constant dense<0.000000e+00> : vector<1x32xf32>
    %33 = tpu.matmul %32, %25, %cst_20 {dimension_numbers = #tpu.dot_dimension_numbers<[1], [0], [0], [1], [0, 0, 1, 1], [], []>} : vector<1x32xf32>, vector<32x32xf32>, vector<1x32xf32> -> vector<1x32xf32>
    %34 = arith.addf %33, %19 : vector<1x32xf32>
    %cst_21 = arith.constant 0.000000e+00 : f32
    %35 = vector.broadcast %cst_21 : f32 to vector<1x32xf32>
    %36 = arith.cmpf oge, %34, %35 : vector<1x32xf32>
    %cst_22 = arith.constant 2.000000e-01 : f32
    %37 = vector.broadcast %cst_22 : f32 to vector<1x32xf32>
    %38 = arith.mulf %37, %34 : vector<1x32xf32>
    %39 = arith.select %36, %34, %38 : vector<1x32xi1>, vector<1x32xf32>
    %cst_23 = arith.constant dense<0.000000e+00> : vector<1x32xf32>
    %40 = tpu.matmul %39, %25, %cst_23 {dimension_numbers = #tpu.dot_dimension_numbers<[1], [0], [0], [1], [0, 0, 1, 1], [], []>} : vector<1x32xf32>, vector<32x32xf32>, vector<1x32xf32> -> vector<1x32xf32>
    %41 = arith.addf %40, %24 : vector<1x32xf32>
    %cst_24 = arith.constant 0.000000e+00 : f32
    %42 = vector.broadcast %cst_24 : f32 to vector<1x32xf32>
    %43 = arith.cmpf oge, %41, %42 : vector<1x32xf32>
    %cst_25 = arith.constant 2.000000e-01 : f32
    %44 = vector.broadcast %cst_25 : f32 to vector<1x32xf32>
    %45 = arith.mulf %44, %41 : vector<1x32xf32>
    %46 = arith.select %43, %41, %45 : vector<1x32xi1>, vector<1x32xf32>
    %c0_26 = arith.constant 0 : index
    %c0_27 = arith.constant 0 : index
    %47 = vector.load %arg4[%c0_26, %c0_27] : memref<32x256xf32, #tpu.memory_space<vmem>>, vector<32x256xf32>
    %cst_28 = arith.constant dense<0.000000e+00> : vector<1x256xf32>
    %48 = tpu.matmul %46, %47, %cst_28 {dimension_numbers = #tpu.dot_dimension_numbers<[1], [0], [0], [1], [0, 0, 1, 1], [], []>} : vector<1x32xf32>, vector<32x256xf32>, vector<1x256xf32> -> vector<1x256xf32>
    %cst_29 = arith.constant dense<0.000000e+00> : vector<4x256xf32>
    %49 = tpu.matmul %1, %47, %cst_29 {dimension_numbers = #tpu.dot_dimension_numbers<[1], [0], [0], [1], [0, 0, 1, 1], [], []>} : vector<4x32xf32>, vector<32x256xf32>, vector<4x256xf32> -> vector<4x256xf32>
    %50 = vector.extract_strided_slice %48 {offsets = [0, 0], sizes = [1, 128], strides = [1, 1]} : vector<1x256xf32> to vector<1x128xf32>
    %51 = vector.extract_strided_slice %48 {offsets = [0, 128], sizes = [1, 128], strides = [1, 1]} : vector<1x256xf32> to vector<1x128xf32>
    %52 = vector.extract_strided_slice %49 {offsets = [0, 0], sizes = [4, 128], strides = [1, 1]} : vector<4x256xf32> to vector<4x128xf32>
    %53 = vector.extract_strided_slice %49 {offsets = [0, 128], sizes = [4, 128], strides = [1, 1]} : vector<4x256xf32> to vector<4x128xf32>
    %c0_30 = arith.constant 0 : index
    %c0_31 = arith.constant 0 : index
    %54 = vector.load %arg3[%c0_30, %c0_31] : memref<568x128xf32, #tpu.memory_space<vmem>>, vector<128x128xf32>
    %55 = arith.addf %50, %51 : vector<1x128xf32>
    %cst_32 = arith.constant 0.000000e+00 : f32
    %56 = vector.broadcast %cst_32 : f32 to vector<1x128xf32>
    %57 = arith.cmpf oge, %55, %56 : vector<1x128xf32>
    %cst_33 = arith.constant 2.000000e-01 : f32
    %58 = vector.broadcast %cst_33 : f32 to vector<1x128xf32>
    %59 = arith.mulf %58, %55 : vector<1x128xf32>
    %60 = arith.select %57, %55, %59 : vector<1x128xi1>, vector<1x128xf32>
    %cst_34 = arith.constant dense<0.000000e+00> : vector<1x128xf32>
    %61 = tpu.matmul %60, %54, %cst_34 {dimension_numbers = #tpu.dot_dimension_numbers<[1], [0], [0], [1], [0, 0, 1, 1], [], []>} : vector<1x128xf32>, vector<128x128xf32>, vector<1x128xf32> -> vector<1x128xf32>
    %62 = vector.broadcast %51 : vector<1x128xf32> to vector<4x128xf32>
    %63 = arith.addf %52, %62 : vector<4x128xf32>
    %cst_35 = arith.constant 0.000000e+00 : f32
    %64 = vector.broadcast %cst_35 : f32 to vector<4x128xf32>
    %65 = arith.cmpf oge, %63, %64 : vector<4x128xf32>
    %cst_36 = arith.constant 2.000000e-01 : f32
    %66 = vector.broadcast %cst_36 : f32 to vector<4x128xf32>
    %67 = arith.mulf %66, %63 : vector<4x128xf32>
    %68 = arith.select %65, %63, %67 : vector<4x128xi1>, vector<4x128xf32>
    %cst_37 = arith.constant dense<0.000000e+00> : vector<4x128xf32>
    %69 = tpu.matmul %68, %54, %cst_37 {dimension_numbers = #tpu.dot_dimension_numbers<[1], [0], [0], [1], [0, 0, 1, 1], [], []>} : vector<4x128xf32>, vector<128x128xf32>, vector<4x128xf32> -> vector<4x128xf32>
    %cst_38 = arith.constant dense<0xFF800000> : vector<128xf32>
    %70 = vector.multi_reduction <maximumf>, %69, %cst_38 [0] : vector<4x128xf32> to vector<128xf32>
    %71 = vector.shape_cast %70 : vector<128xf32> to vector<1x128xf32>
    %72 = arith.maximumf %61, %71 : vector<1x128xf32>
    %73 = arith.subf %61, %72 : vector<1x128xf32>
    %74 = math.exp %73 : vector<1x128xf32>
    %75 = vector.broadcast %72 : vector<1x128xf32> to vector<4x128xf32>
    %76 = arith.subf %69, %75 : vector<4x128xf32>
    %77 = math.exp %76 : vector<4x128xf32>
    %cst_39 = arith.constant dense<0.000000e+00> : vector<128xf32>
    %78 = vector.multi_reduction <add>, %77, %cst_39 [0] : vector<4x128xf32> to vector<128xf32>
    %79 = vector.shape_cast %78 : vector<128xf32> to vector<1x128xf32>
    %80 = arith.addf %74, %79 : vector<1x128xf32>
    %81 = tpu.reciprocal %80 {approx = true} : vector<1x128xf32> -> vector<1x128xf32>
    %82 = arith.mulf %74, %51 : vector<1x128xf32>
    %83 = arith.mulf %77, %53 : vector<4x128xf32>
    %cst_40 = arith.constant dense<0.000000e+00> : vector<128xf32>
    %84 = vector.multi_reduction <add>, %83, %cst_40 [0] : vector<4x128xf32> to vector<128xf32>
    %85 = vector.shape_cast %84 : vector<128xf32> to vector<1x128xf32>
    %86 = arith.addf %82, %85 : vector<1x128xf32>
    %87 = arith.mulf %86, %81 : vector<1x128xf32>
    %c256 = arith.constant 256 : index
    %c0_41 = arith.constant 0 : index
    %88 = vector.load %arg3[%c256, %c0_41] : memref<568x128xf32, #tpu.memory_space<vmem>>, vector<32x128xf32>
    %cst_42 = arith.constant dense<0.000000e+00> : vector<4x128xf32>
    %89 = tpu.matmul %1, %88, %cst_42 {dimension_numbers = #tpu.dot_dimension_numbers<[1], [0], [0], [1], [0, 0, 1, 1], [], []>} : vector<4x32xf32>, vector<32x128xf32>, vector<4x128xf32> -> vector<4x128xf32>
    %c128 = arith.constant 128 : index
    %c0_43 = arith.constant 0 : index
    %90 = vector.load %arg3[%c128, %c0_43] : memref<568x128xf32, #tpu.memory_space<vmem>>, vector<128x128xf32>
    %cst_44 = arith.constant dense<0.000000e+00> : vector<1x128xf32>
    %91 = tpu.matmul %87, %90, %cst_44 {dimension_numbers = #tpu.dot_dimension_numbers<[1], [0], [0], [1], [0, 0, 1, 1], [], []>} : vector<1x128xf32>, vector<128x128xf32>, vector<1x128xf32> -> vector<1x128xf32>
    %92 = vector.broadcast %91 : vector<1x128xf32> to vector<4x128xf32>
    %93 = arith.addf %89, %92 : vector<4x128xf32>
    %c288 = arith.constant 288 : index
    %c0_45 = arith.constant 0 : index
    %94 = vector.load %arg3[%c288, %c0_45] : memref<568x128xf32, #tpu.memory_space<vmem>>, vector<1x128xf32>
    %95 = vector.broadcast %94 : vector<1x128xf32> to vector<4x128xf32>
    %96 = arith.addf %93, %95 : vector<4x128xf32>
    %cst_46 = arith.constant 0.000000e+00 : f32
    %97 = vector.broadcast %cst_46 : f32 to vector<4x128xf32>
    %98 = arith.cmpf oge, %96, %97 : vector<4x128xf32>
    %cst_47 = arith.constant 2.000000e-01 : f32
    %99 = vector.broadcast %cst_47 : f32 to vector<4x128xf32>
    %100 = arith.mulf %99, %96 : vector<4x128xf32>
    %101 = arith.select %98, %96, %100 : vector<4x128xi1>, vector<4x128xf32>
    %c296 = arith.constant 296 : index
    %c0_48 = arith.constant 0 : index
    %102 = vector.load %arg3[%c296, %c0_48] : memref<568x128xf32, #tpu.memory_space<vmem>>, vector<128x128xf32>
    %cst_49 = arith.constant dense<0.000000e+00> : vector<4x128xf32>
    %103 = tpu.matmul %101, %102, %cst_49 {dimension_numbers = #tpu.dot_dimension_numbers<[1], [0], [0], [1], [0, 0, 1, 1], [], []>} : vector<4x128xf32>, vector<128x128xf32>, vector<4x128xf32> -> vector<4x128xf32>
    %c424 = arith.constant 424 : index
    %c0_50 = arith.constant 0 : index
    %104 = vector.load %arg3[%c424, %c0_50] : memref<568x128xf32, #tpu.memory_space<vmem>>, vector<1x128xf32>
    %105 = vector.broadcast %104 : vector<1x128xf32> to vector<4x128xf32>
    %106 = arith.addf %103, %105 : vector<4x128xf32>
    %cst_51 = arith.constant 0.000000e+00 : f32
    %107 = vector.broadcast %cst_51 : f32 to vector<4x128xf32>
    %108 = arith.cmpf oge, %106, %107 : vector<4x128xf32>
    %cst_52 = arith.constant 2.000000e-01 : f32
    %109 = vector.broadcast %cst_52 : f32 to vector<4x128xf32>
    %110 = arith.mulf %109, %106 : vector<4x128xf32>
    %111 = arith.select %108, %106, %110 : vector<4x128xi1>, vector<4x128xf32>
    %c432 = arith.constant 432 : index
    %c0_53 = arith.constant 0 : index
    %112 = vector.load %arg3[%c432, %c0_53] : memref<568x128xf32, #tpu.memory_space<vmem>>, vector<128x128xf32>
    %cst_54 = arith.constant dense<0.000000e+00> : vector<4x128xf32>
    %113 = tpu.matmul %111, %112, %cst_54 {dimension_numbers = #tpu.dot_dimension_numbers<[1], [0], [0], [1], [0, 0, 1, 1], [], []>} : vector<4x128xf32>, vector<128x128xf32>, vector<4x128xf32> -> vector<4x128xf32>
    %c560 = arith.constant 560 : index
    %c0_55 = arith.constant 0 : index
    %114 = vector.load %arg3[%c560, %c0_55] : memref<568x128xf32, #tpu.memory_space<vmem>>, vector<1x128xf32>
    %115 = vector.broadcast %114 : vector<1x128xf32> to vector<4x128xf32>
    %116 = arith.addf %113, %115 : vector<4x128xf32>
    %117 = math.absf %116 : vector<4x128xf32>
    %cst_56 = arith.constant 0.000000e+00 : f32
    %118 = vector.broadcast %cst_56 : f32 to vector<4x128xf32>
    %119 = arith.subf %118, %117 : vector<4x128xf32>
    %120 = math.exp %119 : vector<4x128xf32>
    %cst_57 = arith.constant 1.000000e+00 : f32
    %121 = vector.broadcast %cst_57 : f32 to vector<4x128xf32>
    %122 = arith.addf %121, %120 : vector<4x128xf32>
    %cst_58 = arith.constant 1.000000e+00 : f32
    %123 = vector.broadcast %cst_58 : f32 to vector<4x128xf32>
    %124 = arith.divf %123, %122 : vector<4x128xf32>
    %cst_59 = arith.constant 0.000000e+00 : f32
    %125 = vector.broadcast %cst_59 : f32 to vector<4x128xf32>
    %126 = arith.cmpf oge, %116, %125 : vector<4x128xf32>
    %127 = arith.mulf %120, %124 : vector<4x128xf32>
    %128 = arith.select %126, %124, %127 : vector<4x128xi1>, vector<4x128xf32>
    %129 = vector.extract_strided_slice %128 {offsets = [0, 0], sizes = [4, 3], strides = [1, 1]} : vector<4x128xf32> to vector<4x3xf32>
    %c0_60 = arith.constant 0 : index
    %c0_61 = arith.constant 0 : index
    %130 = vector.load %arg5[%c0_60, %c0_61] : memref<4x3xf32, #tpu.memory_space<vmem>>, vector<4x3xf32>
    tpu.vector_store %arg5[%c0_60, %c0_61], %129 {strides = array<i32>} : memref<4x3xf32, #tpu.memory_space<vmem>>, vector<4x3xf32>,
    return
  }
}

</mosaic_0001>

<llo_original>
// kernel: mlrole_forward.1
$region0: #{mlrole_forward.1}
  #allocation0 [shape = 'u32[]', space=smem, size = 0x4, offset = 0x4, fixed_abs, tag = 'smem constant byte address 0x4 - core index']
  #allocation1 [shape = 'u32[144,128]{1,0:T(1,128)}', space=vmem, size = 0x12000, scoped, tag = 'internal scratch']
  %s0 = inlined_call_operand.vmem [shape: f32[24,32], index: 0, kind: input, shape index: {}]
  %s1 = inlined_call_operand.vmem [shape: f32[3,6], index: 1, kind: input, shape index: {}]
  %s2 = inlined_call_operand.vmem [shape: f32[176,32], index: 2, kind: input, shape index: {}]
  %s3 = inlined_call_operand.hbm [shape: f32[568,128], index: 3, kind: input, shape index: {}]
  %s4 = inlined_call_operand.vmem [shape: f32[32,256], index: 4, kind: input, shape index: {}]
  %s5 = inlined_call_operand.hbm [shape: f32[4,3], index: 5, kind: output, shape index: {}]
  %s6 = sld [smem:[#allocation0]]
  $region34: #{mlrole_forward.1} parent=0
    _
  %s8 = ssub.s32 1, %s6
  %s9 = scalar_select 0, %s8, %s6
  $region1: #{mlrole_forward.1} parent=0
    #allocation2 [shape = 'u8[290816]{0}', space=vmem, size = 0x47000, scoped, tag = 'input window, operand 3, single buffered']
    #allocation3 [shape = 's32[1]{0}', space=sflag, size = 0x4, scoped, tag = 'scoped memory for mlrole_forward.1']
    #allocation4 [shape = 's32[1]{0}', space=sflag, size = 0x4, scoped, tag = 'scoped memory for mlrole_forward.1']
    #allocation5 [shape = 'u8[2048]{0}', space=vmem, size = 0x800, scoped, tag = 'output window, operand 0, single buffered']
    %10 = vsyncpa [#allocation3], 0
    %11 = vsyncpa [#allocation4], 0
    // Predicated region
    $region2: #{mlrole_forward.1} parent=1 // pred_check
      _
    $region3: #{mlrole_forward.1} parent=1 // pred_check_branch
      %13 = sbr.rel (0) target = $region5
    $region4: #{mlrole_forward.1} parent=1 // pred_region
      _
    $region5: #{mlrole_forward.1} parent=1 // pred_fallthru
      _
    // Predicated region
    $region6: #{mlrole_forward.1} parent=1 // pred_check
      _
    $region7: #{mlrole_forward.1} parent=1 // pred_check_branch
      %15 = sbr.rel (0) target = $region9
    $region8: #{mlrole_forward.1} parent=1 // pred_region
      _
    $region9: #{mlrole_forward.1} parent=1 // pred_fallthru
      _
    // Predicated region
    $region10: #{mlrole_forward.1} parent=1 // pred_check
      _
    $region11: #{mlrole_forward.1} parent=1 // pred_check_branch
      %17 = sbr.rel (0) target = $region13
    $region12: #{mlrole_forward.1} parent=1 // pred_region
      _
    $region13: #{mlrole_forward.1} parent=1 // pred_fallthru
      _
    // Predicated region
    $region14: #{mlrole_forward.1} parent=1 // pred_check
      _
    $region15: #{mlrole_forward.1} parent=1 // pred_check_branch
      %19 = sbr.rel (0) target = $region17
    $region16: #{mlrole_forward.1} parent=1 // pred_region
      %s21 = ssub.s32 9088, 9088
      %22 = vsyncadd [#allocation3], %s21
      %s23 = sshll.u32 [#allocation2], 4
      %s24 = int_to_ptr.vmem [resolvable:$true] %s23
      %29 = dma.hbm_to_vmem [thread:$0]  %s3, 9088, %s24, [#allocation3], 128, 128, 8
    $region17: #{mlrole_forward.1} parent=1 // pred_fallthru
      _
    // Predicated region
    $region18: #{mlrole_forward.1} parent=1 // pred_check
      _
    $region19: #{mlrole_forward.1} parent=1 // pred_check_branch
      %31 = sbr.rel (0) target = $region21
    $region20: #{mlrole_forward.1} parent=1 // pred_region
      _
    $region21: #{mlrole_forward.1} parent=1 // pred_fallthru
      _
    // Predicated region
    $region22: #{mlrole_forward.1} parent=1 // pred_check
      _
    $region23: #{mlrole_forward.1} parent=1 // pred_check_branch
      %33 = sbr.rel (0) target = $region25
    $region24: #{mlrole_forward.1} parent=1 // pred_region
      %34 = dma.done [#allocation3], 9088
    $region25: #{mlrole_forward.1} parent=1 // pred_fallthru
      _
    %v35 = vld [vmem:[%s0] sm:$0x1]
    %v36 = vld [vmem:[%s0 + $0x8] sm:$0xf]
    %v37 = vld [vmem:[%s0 + $0x10] sm:$0x3f]
    %v38 = vld [vmem:[%s2] sm:$0xff]
    %v39 = vld [vmem:[%s2 + $0x8] sm:$0xff]
    %v40 = vld [vmem:[%s2 + $0x10] sm:$0xff]
    %v41 = vld [vmem:[%s2 + $0x18] sm:$0xff]
    %v42 = vld [vmem:[%s2 + $0x20] sm:$0x1]
    %vm43 = vcmask 261120
    %v45 = vsel %vm43, %v35, 0
    %47 = vmatprep.subr.mxu0 0.0
    %48 = vmatpush1.msra.mxu0 0.0
    %49 = vmatprep.subr.mxu0 0.0
    %50 = vmatpush1.msra.mxu0 0.0
    %51 = vmatprep.subr.mxu0 0.0
    %52 = vmatpush1.msra.mxu0 0.0
    %53 = vmatprep.subr.mxu0 0.0
    %54 = vmatpush1.msra.mxu0 0.0
    %55 = vmatprep.subr.mxu0 0.0
    %56 = vmatpush1.msra.mxu0 0.0
    %57 = vmatprep.subr.mxu0 0.0
    %58 = vmatpush1.msra.mxu0 0.0
    %59 = vmatprep.subr.mxu0 0.0
    %60 = vmatpush1.msra.mxu0 0.0
    %61 = vmatprep.subr.mxu0 0.0
    %62 = vmatpush1.msra.mxu0 0.0
    %63 = vmatprep.subr.mxu0 0.0
    %64 = vmatpush1.msra.mxu0 0.0
    %65 = vmatprep.subr.mxu0 0.0
    %66 = vmatpush1.msra.mxu0 0.0
    %67 = vmatprep.subr.mxu0 0.0
    %68 = vmatpush1.msra.mxu0 0.0
    %69 = vmatprep.subr.mxu0 0.0
    %70 = vmatpush1.msra.mxu0 0.0
    %71 = vmatprep.subr.mxu0 0.0
    %72 = vmatpush1.msra.mxu0 %v41
    %73 = vmatprep.subr.mxu0 0.0
    %74 = vmatpush1.msra.mxu0 %v40
    %75 = vmatprep.subr.mxu0 0.0
    %76 = vmatpush1.msra.mxu0 %v39
    %77 = vmatprep.subr.mxu0 0.0
    %78 = vmatpush1.msra.mxu0 %v38
    %79 = vmatprep.subr.mxu0 0.0
    %80 = vmatpush2.msra.mxu0 0.0
    %81 = vmatprep.subr.mxu0 0.0
    %82 = vmatpush2.msra.mxu0 0.0
    %83 = vmatprep.subr.mxu0 0.0
    %84 = vmatpush2.msra.mxu0 0.0
    %85 = vmatprep.subr.mxu0 0.0
    %86 = vmatpush2.msra.mxu0 0.0
    %87 = vmatprep.subr.mxu0 0.0
    %88 = vmatpush2.msra.mxu0 0.0
    %89 = vmatprep.subr.mxu0 0.0
    %90 = vmatpush2.msra.mxu0 0.0
    %91 = vmatprep.subr.mxu0 0.0
    %92 = vmatpush2.msra.mxu0 0.0
    %93 = vmatprep.subr.mxu0 0.0
    %94 = vmatpush2.msra.mxu0 0.0
    %95 = vmatprep.subr.mxu0 0.0
    %96 = vmatpush2.msra.mxu0 0.0
    %97 = vmatprep.subr.mxu0 0.0
    %98 = vmatpush2.msra.mxu0 0.0
    %99 = vmatprep.subr.mxu0 0.0
    %100 = vmatpush2.msra.mxu0 0.0
    %101 = vmatprep.subr.mxu0 0.0
    %102 = vmatpush2.msra.mxu0 0.0
    %103 = vmatprep.subr.mxu0 0.0
    %104 = vmatpush2.msra.mxu0 0.0
    %105 = vmatprep.subr.mxu0 0.0
    %106 = vmatpush2.msra.mxu0 0.0
    %107 = vmatprep.subr.mxu0 0.0
    %108 = vmatpush2.msra.mxu0 0.0
    %109 = vmatprep.subr.mxu0 0.0
    %110 = vmatpush2.msra.mxu0 0.0
    %111 = vmatprep.mubr.f32.mxu0 0.0
    %112 = vmatmul.mubr.f32.gmra.mxu0 %v45
    %v113 = vpop.f32.mrf.mxu0
    %v114 = vadd.f32 %v42, %v113
    %v115 = vpop.f32.mrf.mxu0
    %116 = vdwg.mxu0
    %v117 = vld [vmem:[%s1] sm:$0x7]
    %vm118 = vcmask 48128
    %v120 = vsel %vm118, %v117, 0
    %vm122 = vcmask 1045504
    %v124 = vsel %vm122, %v37, 0
    %126 = vmatprep.subr.mxu0 0.0
    %127 = vmatpush1.msra.mxu0 0.0
    %128 = vmatprep.subr.mxu0 0.0
    %129 = vmatpush1.msra.mxu0 0.0
    %130 = vmatprep.subr.mxu0 0.0
    %131 = vmatpush1.msra.mxu0 0.0
    %132 = vmatprep.subr.mxu0 0.0
    %133 = vmatpush1.msra.mxu0 0.0
    %134 = vmatprep.subr.mxu0 0.0
    %135 = vmatpush1.msra.mxu0 0.0
    %136 = vmatprep.subr.mxu0 0.0
    %137 = vmatpush1.msra.mxu0 0.0
    %138 = vmatprep.subr.mxu0 0.0
    %139 = vmatpush1.msra.mxu0 0.0
    %140 = vmatprep.subr.mxu0 0.0
    %141 = vmatpush1.msra.mxu0 0.0
    %142 = vmatprep.subr.mxu0 0.0
    %143 = vmatpush1.msra.mxu0 0.0
    %144 = vmatprep.subr.mxu0 0.0
    %145 = vmatpush1.msra.mxu0 0.0
    %146 = vmatprep.subr.mxu0 0.0
    %147 = vmatpush1.msra.mxu0 0.0
    %148 = vmatprep.subr.mxu0 0.0
    %149 = vmatpush1.msra.mxu0 0.0
    %150 = vmatprep.subr.mxu0 0.0
    %151 = vmatpush1.msra.mxu0 0.0
    %152 = vmatprep.subr.mxu0 0.0
    %153 = vmatpush1.msra.mxu0 0.0
    %154 = vmatprep.subr.mxu0 0.0
    %155 = vmatpush1.msra.mxu0 0.0
    %156 = vmatprep.subr.mxu0 0.0
    %157 = vmatpush1.msra.mxu0 %v124
    %158 = vmatprep.subr.mxu0 0.0
    %159 = vmatpush2.msra.mxu0 0.0
    %160 = vmatprep.subr.mxu0 0.0
    %161 = vmatpush2.msra.mxu0 0.0
    %162 = vmatprep.subr.mxu0 0.0
    %163 = vmatpush2.msra.mxu0 0.0
    %164 = vmatprep.subr.mxu0 0.0
    %165 = vmatpush2.msra.mxu0 0.0
    %166 = vmatprep.subr.mxu0 0.0
    %167 = vmatpush2.msra.mxu0 0.0
    %168 = vmatprep.subr.mxu0 0.0
    %169 = vmatpush2.msra.mxu0 0.0
    %170 = vmatprep.subr.mxu0 0.0
    %171 = vmatpush2.msra.mxu0 0.0
    %172 = vmatprep.subr.mxu0 0.0
    %173 = vmatpush2.msra.mxu0 0.0
    %174 = vmatprep.subr.mxu0 0.0
    %175 = vmatpush2.msra.mxu0 0.0
    %176 = vmatprep.subr.mxu0 0.0
    %177 = vmatpush2.msra.mxu0 0.0
    %178 = vmatprep.subr.mxu0 0.0
    %179 = vmatpush2.msra.mxu0 0.0
    %180 = vmatprep.subr.mxu0 0.0
    %181 = vmatpush2.msra.mxu0 0.0
    %182 = vmatprep.subr.mxu0 0.0
    %183 = vmatpush2.msra.mxu0 0.0
    %184 = vmatprep.subr.mxu0 0.0
    %185 = vmatpush2.msra.mxu0 0.0
    %186 = vmatprep.subr.mxu0 0.0
    %187 = vmatpush2.msra.mxu0 0.0
    %188 = vmatprep.subr.mxu0 0.0
    %189 = vmatpush2.msra.mxu0 0.0
    %190 = vmatprep.mubr.f32.mxu0 0.0
    %191 = vmatmul.mubr.f32.gmra.mxu0 %v120
    %v192 = vpop.f32.mrf.mxu0
    %v193 = vadd.f32 0.0, %v192
    %v194 = vpop.f32.mrf.mxu0
    %195 = vdwg.mxu0
    %v196 = vld [vmem:[%s2 + $0x88] sm:$0x7]
    %v197 = vld [vmem:[%s2 + $0x28] sm:$0xff]
    %v198 = vld [vmem:[%s2 + $0x30] sm:$0xff]
    %v199 = vld [vmem:[%s2 + $0x38] sm:$0xff]
    %v200 = vld [vmem:[%s2 + $0x40] sm:$0xff]
    %v202 = vsel %vm43, %v193, 0
    %204 = vmatprep.subr.mxu0 0.0
    %205 = vmatpush1.msra.mxu0 0.0
    %206 = vmatprep.subr.mxu0 0.0
    %207 = vmatpush1.msra.mxu0 0.0
    %208 = vmatprep.subr.mxu0 0.0
    %209 = vmatpush1.msra.mxu0 0.0
    %210 = vmatprep.subr.mxu0 0.0
    %211 = vmatpush1.msra.mxu0 0.0
    %212 = vmatprep.subr.mxu0 0.0
    %213 = vmatpush1.msra.mxu0 0.0
    %214 = vmatprep.subr.mxu0 0.0
    %215 = vmatpush1.msra.mxu0 0.0
    %216 = vmatprep.subr.mxu0 0.0
    %217 = vmatpush1.msra.mxu0 0.0
    %218 = vmatprep.subr.mxu0 0.0
    %219 = vmatpush1.msra.mxu0 0.0
    %220 = vmatprep.subr.mxu0 0.0
    %221 = vmatpush1.msra.mxu0 0.0
    %222 = vmatprep.subr.mxu0 0.0
    %223 = vmatpush1.msra.mxu0 0.0
    %224 = vmatprep.subr.mxu0 0.0
    %225 = vmatpush1.msra.mxu0 0.0
    %226 = vmatprep.subr.mxu0 0.0
    %227 = vmatpush1.msra.mxu0 0.0
    %228 = vmatprep.subr.mxu0 0.0
    %229 = vmatpush1.msra.mxu0 %v200
    %230 = vmatprep.subr.mxu0 0.0
    %231 = vmatpush1.msra.mxu0 %v199
    %232 = vmatprep.subr.mxu0 0.0
    %233 = vmatpush1.msra.mxu0 %v198
    %234 = vmatprep.subr.mxu0 0.0
    %235 = vmatpush1.msra.mxu0 %v197
    %236 = vmatprep.subr.mxu0 0.0
    %237 = vmatpush2.msra.mxu0 0.0
    %238 = vmatprep.subr.mxu0 0.0
    %239 = vmatpush2.msra.mxu0 0.0
    %240 = vmatprep.subr.mxu0 0.0
    %241 = vmatpush2.msra.mxu0 0.0
    %242 = vmatprep.subr.mxu0 0.0
    %243 = vmatpush2.msra.mxu0 0.0
    %244 = vmatprep.subr.mxu0 0.0
    %245 = vmatpush2.msra.mxu0 0.0
    %246 = vmatprep.subr.mxu0 0.0
    %247 = vmatpush2.msra.mxu0 0.0
    %248 = vmatprep.subr.mxu0 0.0
    %249 = vmatpush2.msra.mxu0 0.0
    %250 = vmatprep.subr.mxu0 0.0
    %251 = vmatpush2.msra.mxu0 0.0
    %252 = vmatprep.subr.mxu0 0.0
    %253 = vmatpush2.msra.mxu0 0.0
    %254 = vmatprep.subr.mxu0 0.0
    %255 = vmatpush2.msra.mxu0 0.0
    %256 = vmatprep.subr.mxu0 0.0
    %257 = vmatpush2.msra.mxu0 0.0
    %258 = vmatprep.subr.mxu0 0.0
    %259 = vmatpush2.msra.mxu0 0.0
    %260 = vmatprep.subr.mxu0 0.0
    %261 = vmatpush2.msra.mxu0 0.0
    %262 = vmatprep.subr.mxu0 0.0
    %263 = vmatpush2.msra.mxu0 0.0
    %264 = vmatprep.subr.mxu0 0.0
    %265 = vmatpush2.msra.mxu0 0.0
    %266 = vmatprep.subr.mxu0 0.0
    %267 = vmatpush2.msra.mxu0 0.0
    %268 = vmatprep.mubr.f32.mxu0 0.0
    %269 = vmatmul.mubr.f32.gmra.mxu0 %v202
    %v270 = vpop.f32.mrf.mxu0
    %v271 = vadd.f32 %v196, %v270
    %v272 = vpop.f32.mrf.mxu0
    %273 = vdwg.mxu0
    %v274 = vld [vmem:[%s2 + $0x48] sm:$0xff]
    %v275 = vld [vmem:[%s2 + $0x50] sm:$0xff]
    %v276 = vld [vmem:[%s2 + $0x58] sm:$0xff]
    %v277 = vld [vmem:[%s2 + $0x60] sm:$0xff]
    %v278 = vrot.slane %v193, 1
    %v280 = vrot.slane %v196, 1
    %v282 = vsel %vm43, %v278, 0
    %284 = vmatprep.subr.mxu0 0.0
    %285 = vmatpush1.msra.mxu0 0.0
    %286 = vmatprep.subr.mxu0 0.0
    %287 = vmatpush1.msra.mxu0 0.0
    %288 = vmatprep.subr.mxu0 0.0
    %289 = vmatpush1.msra.mxu0 0.0
    %290 = vmatprep.subr.mxu0 0.0
    %291 = vmatpush1.msra.mxu0 0.0
    %292 = vmatprep.subr.mxu0 0.0
    %293 = vmatpush1.msra.mxu0 0.0
    %294 = vmatprep.subr.mxu0 0.0
    %295 = vmatpush1.msra.mxu0 0.0
    %296 = vmatprep.subr.mxu0 0.0
    %297 = vmatpush1.msra.mxu0 0.0
    %298 = vmatprep.subr.mxu0 0.0
    %299 = vmatpush1.msra.mxu0 0.0
    %300 = vmatprep.subr.mxu0 0.0
    %301 = vmatpush1.msra.mxu0 0.0
    %302 = vmatprep.subr.mxu0 0.0
    %303 = vmatpush1.msra.mxu0 0.0
    %304 = vmatprep.subr.mxu0 0.0
    %305 = vmatpush1.msra.mxu0 0.0
    %306 = vmatprep.subr.mxu0 0.0
    %307 = vmatpush1.msra.mxu0 0.0
    %308 = vmatprep.subr.mxu0 0.0
    %309 = vmatpush1.msra.mxu0 %v277
    %310 = vmatprep.subr.mxu0 0.0
    %311 = vmatpush1.msra.mxu0 %v276
    %312 = vmatprep.subr.mxu0 0.0
    %313 = vmatpush1.msra.mxu0 %v275
    %314 = vmatprep.subr.mxu0 0.0
    %315 = vmatpush1.msra.mxu0 %v274
    %316 = vmatprep.subr.mxu0 0.0
    %317 = vmatpush2.msra.mxu0 0.0
    %318 = vmatprep.subr.mxu0 0.0
    %319 = vmatpush2.msra.mxu0 0.0
    %320 = vmatprep.subr.mxu0 0.0
    %321 = vmatpush2.msra.mxu0 0.0
    %322 = vmatprep.subr.mxu0 0.0
    %323 = vmatpush2.msra.mxu0 0.0
    %324 = vmatprep.subr.mxu0 0.0
    %325 = vmatpush2.msra.mxu0 0.0
    %326 = vmatprep.subr.mxu0 0.0
    %327 = vmatpush2.msra.mxu0 0.0
    %328 = vmatprep.subr.mxu0 0.0
    %329 = vmatpush2.msra.mxu0 0.0
    %330 = vmatprep.subr.mxu0 0.0
    %331 = vmatpush2.msra.mxu0 0.0
    %332 = vmatprep.subr.mxu0 0.0
    %333 = vmatpush2.msra.mxu0 0.0
    %334 = vmatprep.subr.mxu0 0.0
    %335 = vmatpush2.msra.mxu0 0.0
    %336 = vmatprep.subr.mxu0 0.0
    %337 = vmatpush2.msra.mxu0 0.0
    %338 = vmatprep.subr.mxu0 0.0
    %339 = vmatpush2.msra.mxu0 0.0
    %340 = vmatprep.subr.mxu0 0.0
    %341 = vmatpush2.msra.mxu0 0.0
    %342 = vmatprep.subr.mxu0 0.0
    %343 = vmatpush2.msra.mxu0 0.0
    %344 = vmatprep.subr.mxu0 0.0
    %345 = vmatpush2.msra.mxu0 0.0
    %346 = vmatprep.subr.mxu0 0.0
    %347 = vmatpush2.msra.mxu0 0.0
    %348 = vmatprep.mubr.f32.mxu0 0.0
    %349 = vmatmul.mubr.f32.gmra.mxu0 %v282
    %v350 = vpop.f32.mrf.mxu0
    %v351 = vadd.f32 %v280, %v350
    %v352 = vpop.f32.mrf.mxu0
    %353 = vdwg.mxu0
    %v354 = vld [vmem:[%s2 + $0x68] sm:$0xff]
    %v355 = vld [vmem:[%s2 + $0x70] sm:$0xff]
    %v356 = vld [vmem:[%s2 + $0x78] sm:$0xff]
    %v357 = vld [vmem:[%s2 + $0x80] sm:$0xff]
    %v358 = vrot.slane %v193, 2
    %v359 = vrot.slane %v196, 2
    %v361 = vsel %vm43, %v358, 0
    %363 = vmatprep.subr.mxu0 0.0
    %364 = vmatpush1.msra.mxu0 0.0
    %365 = vmatprep.subr.mxu0 0.0
    %366 = vmatpush1.msra.mxu0 0.0
    %367 = vmatprep.subr.mxu0 0.0
    %368 = vmatpush1.msra.mxu0 0.0
    %369 = vmatprep.subr.mxu0 0.0
    %370 = vmatpush1.msra.mxu0 0.0
    %371 = vmatprep.subr.mxu0 0.0
    %372 = vmatpush1.msra.mxu0 0.0
    %373 = vmatprep.subr.mxu0 0.0
    %374 = vmatpush1.msra.mxu0 0.0
    %375 = vmatprep.subr.mxu0 0.0
    %376 = vmatpush1.msra.mxu0 0.0
    %377 = vmatprep.subr.mxu0 0.0
    %378 = vmatpush1.msra.mxu0 0.0
    %379 = vmatprep.subr.mxu0 0.0
    %380 = vmatpush1.msra.mxu0 0.0
    %381 = vmatprep.subr.mxu0 0.0
    %382 = vmatpush1.msra.mxu0 0.0
    %383 = vmatprep.subr.mxu0 0.0
    %384 = vmatpush1.msra.mxu0 0.0
    %385 = vmatprep.subr.mxu0 0.0
    %386 = vmatpush1.msra.mxu0 0.0
    %387 = vmatprep.subr.mxu0 0.0
    %388 = vmatpush1.msra.mxu0 %v357
    %389 = vmatprep.subr.mxu0 0.0
    %390 = vmatpush1.msra.mxu0 %v356
    %391 = vmatprep.subr.mxu0 0.0
    %392 = vmatpush1.msra.mxu0 %v355
    %393 = vmatprep.subr.mxu0 0.0
    %394 = vmatpush1.msra.mxu0 %v354
    %395 = vmatprep.subr.mxu0 0.0
    %396 = vmatpush2.msra.mxu0 0.0
    %397 = vmatprep.subr.mxu0 0.0
    %398 = vmatpush2.msra.mxu0 0.0
    %399 = vmatprep.subr.mxu0 0.0
    %400 = vmatpush2.msra.mxu0 0.0
    %401 = vmatprep.subr.mxu0 0.0
    %402 = vmatpush2.msra.mxu0 0.0
    %403 = vmatprep.subr.mxu0 0.0
    %404 = vmatpush2.msra.mxu0 0.0
    %405 = vmatprep.subr.mxu0 0.0
    %406 = vmatpush2.msra.mxu0 0.0
    %407 = vmatprep.subr.mxu0 0.0
    %408 = vmatpush2.msra.mxu0 0.0
    %409 = vmatprep.subr.mxu0 0.0
    %410 = vmatpush2.msra.mxu0 0.0
    %411 = vmatprep.subr.mxu0 0.0
    %412 = vmatpush2.msra.mxu0 0.0
    %413 = vmatprep.subr.mxu0 0.0
    %414 = vmatpush2.msra.mxu0 0.0
    %415 = vmatprep.subr.mxu0 0.0
    %416 = vmatpush2.msra.mxu0 0.0
    %417 = vmatprep.subr.mxu0 0.0
    %418 = vmatpush2.msra.mxu0 0.0
    %419 = vmatprep.subr.mxu0 0.0
    %420 = vmatpush2.msra.mxu0 0.0
    %421 = vmatprep.subr.mxu0 0.0
    %422 = vmatpush2.msra.mxu0 0.0
    %423 = vmatprep.subr.mxu0 0.0
    %424 = vmatpush2.msra.mxu0 0.0
    %425 = vmatprep.subr.mxu0 0.0
    %426 = vmatpush2.msra.mxu0 0.0
    %427 = vmatprep.mubr.f32.mxu0 0.0
    %428 = vmatmul.mubr.f32.gmra.mxu0 %v361
    %v429 = vpop.f32.mrf.mxu0
    %v430 = vadd.f32 %v359, %v429
    %v431 = vpop.f32.mrf.mxu0
    %432 = vdwg.mxu0
    %v433 = vld [vmem:[%s2 + $0x90] sm:$0xff]
    %v434 = vld [vmem:[%s2 + $0x98] sm:$0xff]
    %v435 = vld [vmem:[%s2 + $0xa0] sm:$0xff]
    %v436 = vld [vmem:[%s2 + $0xa8] sm:$0xff]
    %v438 = vsel %vm43, %v114, 0
    %440 = vmatprep.subr.mxu0 0.0
    %441 = vmatpush1.msra.mxu0 0.0
    %442 = vmatprep.subr.mxu0 0.0
    %443 = vmatpush1.msra.mxu0 0.0
    %444 = vmatprep.subr.mxu0 0.0
    %445 = vmatpush1.msra.mxu0 0.0
    %446 = vmatprep.subr.mxu0 0.0
    %447 = vmatpush1.msra.mxu0 0.0
    %448 = vmatprep.subr.mxu0 0.0
    %449 = vmatpush1.msra.mxu0 0.0
    %450 = vmatprep.subr.mxu0 0.0
    %451 = vmatpush1.msra.mxu0 0.0
    %452 = vmatprep.subr.mxu0 0.0
    %453 = vmatpush1.msra.mxu0 0.0
    %454 = vmatprep.subr.mxu0 0.0
    %455 = vmatpush1.msra.mxu0 0.0
    %456 = vmatprep.subr.mxu0 0.0
    %457 = vmatpush1.msra.mxu0 0.0
    %458 = vmatprep.subr.mxu0 0.0
    %459 = vmatpush1.msra.mxu0 0.0
    %460 = vmatprep.subr.mxu0 0.0
    %461 = vmatpush1.msra.mxu0 0.0
    %462 = vmatprep.subr.mxu0 0.0
    %463 = vmatpush1.msra.mxu0 0.0
    %464 = vmatprep.subr.mxu0 0.0
    %465 = vmatpush1.msra.mxu0 %v436
    %466 = vmatprep.subr.mxu0 0.0
    %467 = vmatpush1.msra.mxu0 %v435
    %468 = vmatprep.subr.mxu0 0.0
    %469 = vmatpush1.msra.mxu0 %v434
    %470 = vmatprep.subr.mxu0 0.0
    %471 = vmatpush1.msra.mxu0 %v433
    %472 = vmatprep.subr.mxu0 0.0
    %473 = vmatpush2.msra.mxu0 0.0
    %474 = vmatprep.subr.mxu0 0.0
    %475 = vmatpush2.msra.mxu0 0.0
    %476 = vmatprep.subr.mxu0 0.0
    %477 = vmatpush2.msra.mxu0 0.0
    %478 = vmatprep.subr.mxu0 0.0
    %479 = vmatpush2.msra.mxu0 0.0
    %480 = vmatprep.subr.mxu0 0.0
    %481 = vmatpush2.msra.mxu0 0.0
    %482 = vmatprep.subr.mxu0 0.0
    %483 = vmatpush2.msra.mxu0 0.0
    %484 = vmatprep.subr.mxu0 0.0
    %485 = vmatpush2.msra.mxu0 0.0
    %486 = vmatprep.subr.mxu0 0.0
    %487 = vmatpush2.msra.mxu0 0.0
    %488 = vmatprep.subr.mxu0 0.0
    %489 = vmatpush2.msra.mxu0 0.0
    %490 = vmatprep.subr.mxu0 0.0
    %491 = vmatpush2.msra.mxu0 0.0
    %492 = vmatprep.subr.mxu0 0.0
    %493 = vmatpush2.msra.mxu0 0.0
    %494 = vmatprep.subr.mxu0 0.0
    %495 = vmatpush2.msra.mxu0 0.0
    %496 = vmatprep.subr.mxu0 0.0
    %497 = vmatpush2.msra.mxu0 0.0
    %498 = vmatprep.subr.mxu0 0.0
    %499 = vmatpush2.msra.mxu0 0.0
    %500 = vmatprep.subr.mxu0 0.0
    %501 = vmatpush2.msra.mxu0 0.0
    %502 = vmatprep.subr.mxu0 0.0
    %503 = vmatpush2.msra.mxu0 0.0
    %504 = vmatprep.mubr.f32.mxu0 0.0
    %505 = vmatmul.mubr.f32.gmra.mxu0 %v438
    %v506 = vpop.f32.mrf.mxu0
    %v507 = vadd.f32 %v271, %v506
    %v508 = vpop.f32.mrf.mxu0
    %509 = vdwg.mxu0
    %vm510 = vcmp.ge.f32.partialorder %v507, 0.0
    %v511 = vmul.f32 %v507, 0.2
    %v512 = vsel %vm510, %v507, %v511
    %v514 = vsel %vm43, %v512, 0
    %516 = vmatprep.subr.mxu0 0.0
    %517 = vmatpush1.msra.mxu0 0.0
    %518 = vmatprep.subr.mxu0 0.0
    %519 = vmatpush1.msra.mxu0 0.0
    %520 = vmatprep.subr.mxu0 0.0
    %521 = vmatpush1.msra.mxu0 0.0
    %522 = vmatprep.subr.mxu0 0.0
    %523 = vmatpush1.msra.mxu0 0.0
    %524 = vmatprep.subr.mxu0 0.0
    %525 = vmatpush1.msra.mxu0 0.0
    %526 = vmatprep.subr.mxu0 0.0
    %527 = vmatpush1.msra.mxu0 0.0
    %528 = vmatprep.subr.mxu0 0.0
    %529 = vmatpush1.msra.mxu0 0.0
    %530 = vmatprep.subr.mxu0 0.0
    %531 = vmatpush1.msra.mxu0 0.0
    %532 = vmatprep.subr.mxu0 0.0
    %533 = vmatpush1.msra.mxu0 0.0
    %534 = vmatprep.subr.mxu0 0.0
    %535 = vmatpush1.msra.mxu0 0.0
    %536 = vmatprep.subr.mxu0 0.0
    %537 = vmatpush1.msra.mxu0 0.0
    %538 = vmatprep.subr.mxu0 0.0
    %539 = vmatpush1.msra.mxu0 0.0
    %540 = vmatprep.subr.mxu0 0.0
    %541 = vmatpush1.msra.mxu0 %v436
    %542 = vmatprep.subr.mxu0 0.0
    %543 = vmatpush1.msra.mxu0 %v435
    %544 = vmatprep.subr.mxu0 0.0
    %545 = vmatpush1.msra.mxu0 %v434
    %546 = vmatprep.subr.mxu0 0.0
    %547 = vmatpush1.msra.mxu0 %v433
    %548 = vmatprep.subr.mxu0 0.0
    %549 = vmatpush2.msra.mxu0 0.0
    %550 = vmatprep.subr.mxu0 0.0
    %551 = vmatpush2.msra.mxu0 0.0
    %552 = vmatprep.subr.mxu0 0.0
    %553 = vmatpush2.msra.mxu0 0.0
    %554 = vmatprep.subr.mxu0 0.0
    %555 = vmatpush2.msra.mxu0 0.0
    %556 = vmatprep.subr.mxu0 0.0
    %557 = vmatpush2.msra.mxu0 0.0
    %558 = vmatprep.subr.mxu0 0.0
    %559 = vmatpush2.msra.mxu0 0.0
    %560 = vmatprep.subr.mxu0 0.0
    %561 = vmatpush2.msra.mxu0 0.0
    %562 = vmatprep.subr.mxu0 0.0
    %563 = vmatpush2.msra.mxu0 0.0
    %564 = vmatprep.subr.mxu0 0.0
    %565 = vmatpush2.msra.mxu0 0.0
    %566 = vmatprep.subr.mxu0 0.0
    %567 = vmatpush2.msra.mxu0 0.0
    %568 = vmatprep.subr.mxu0 0.0
    %569 = vmatpush2.msra.mxu0 0.0
    %570 = vmatprep.subr.mxu0 0.0
    %571 = vmatpush2.msra.mxu0 0.0
    %572 = vmatprep.subr.mxu0 0.0
    %573 = vmatpush2.msra.mxu0 0.0
    %574 = vmatprep.subr.mxu0 0.0
    %575 = vmatpush2.msra.mxu0 0.0
    %576 = vmatprep.subr.mxu0 0.0
    %577 = vmatpush2.msra.mxu0 0.0
    %578 = vmatprep.subr.mxu0 0.0
    %579 = vmatpush2.msra.mxu0 0.0
    %580 = vmatprep.mubr.f32.mxu0 0.0
    %581 = vmatmul.mubr.f32.gmra.mxu0 %v514
    %v582 = vpop.f32.mrf.mxu0
    %v583 = vadd.f32 %v351, %v582
    %v584 = vpop.f32.mrf.mxu0
    %585 = vdwg.mxu0
    %vm586 = vcmp.ge.f32.partialorder %v583, 0.0
    %v587 = vmul.f32 %v583, 0.2
    %v588 = vsel %vm586, %v583, %v587
    %v590 = vsel %vm43, %v588, 0
    %592 = vmatprep.subr.mxu0 0.0
    %593 = vmatpush1.msra.mxu0 0.0
    %594 = vmatprep.subr.mxu0 0.0
    %595 = vmatpush1.msra.mxu0 0.0
    %596 = vmatprep.subr.mxu0 0.0
    %597 = vmatpush1.msra.mxu0 0.0
    %598 = vmatprep.subr.mxu0 0.0
    %599 = vmatpush1.msra.mxu0 0.0
    %600 = vmatprep.subr.mxu0 0.0
    %601 = vmatpush1.msra.mxu0 0.0
    %602 = vmatprep.subr.mxu0 0.0
    %603 = vmatpush1.msra.mxu0 0.0
    %604 = vmatprep.subr.mxu0 0.0
    %605 = vmatpush1.msra.mxu0 0.0
    %606 = vmatprep.subr.mxu0 0.0
    %607 = vmatpush1.msra.mxu0 0.0
    %608 = vmatprep.subr.mxu0 0.0
    %609 = vmatpush1.msra.mxu0 0.0
    %610 = vmatprep.subr.mxu0 0.0
    %611 = vmatpush1.msra.mxu0 0.0
    %612 = vmatprep.subr.mxu0 0.0
    %613 = vmatpush1.msra.mxu0 0.0
    %614 = vmatprep.subr.mxu0 0.0
    %615 = vmatpush1.msra.mxu0 0.0
    %616 = vmatprep.subr.mxu0 0.0
    %617 = vmatpush1.msra.mxu0 %v436
    %618 = vmatprep.subr.mxu0 0.0
    %619 = vmatpush1.msra.mxu0 %v435
    %620 = vmatprep.subr.mxu0 0.0
    %621 = vmatpush1.msra.mxu0 %v434
    %622 = vmatprep.subr.mxu0 0.0
    %623 = vmatpush1.msra.mxu0 %v433
    %624 = vmatprep.subr.mxu0 0.0
    %625 = vmatpush2.msra.mxu0 0.0
    %626 = vmatprep.subr.mxu0 0.0
    %627 = vmatpush2.msra.mxu0 0.0
    %628 = vmatprep.subr.mxu0 0.0
    %629 = vmatpush2.msra.mxu0 0.0
    %630 = vmatprep.subr.mxu0 0.0
    %631 = vmatpush2.msra.mxu0 0.0
    %632 = vmatprep.subr.mxu0 0.0
    %633 = vmatpush2.msra.mxu0 0.0
    %634 = vmatprep.subr.mxu0 0.0
    %635 = vmatpush2.msra.mxu0 0.0
    %636 = vmatprep.subr.mxu0 0.0
    %637 = vmatpush2.msra.mxu0 0.0
    %638 = vmatprep.subr.mxu0 0.0
    %639 = vmatpush2.msra.mxu0 0.0
    %640 = vmatprep.subr.mxu0 0.0
    %641 = vmatpush2.msra.mxu0 0.0
    %642 = vmatprep.subr.mxu0 0.0
    %643 = vmatpush2.msra.mxu0 0.0
    %644 = vmatprep.subr.mxu0 0.0
    %645 = vmatpush2.msra.mxu0 0.0
    %646 = vmatprep.subr.mxu0 0.0
    %647 = vmatpush2.msra.mxu0 0.0
    %648 = vmatprep.subr.mxu0 0.0
    %649 = vmatpush2.msra.mxu0 0.0
    %650 = vmatprep.subr.mxu0 0.0
    %651 = vmatpush2.msra.mxu0 0.0
    %652 = vmatprep.subr.mxu0 0.0
    %653 = vmatpush2.msra.mxu0 0.0
    %654 = vmatprep.subr.mxu0 0.0
    %655 = vmatpush2.msra.mxu0 0.0
    %656 = vmatprep.mubr.f32.mxu0 0.0
    %657 = vmatmul.mubr.f32.gmra.mxu0 %v590
    %v658 = vpop.f32.mrf.mxu0
    %v659 = vadd.f32 %v430, %v658
    %v660 = vpop.f32.mrf.mxu0
    %661 = vdwg.mxu0
    %vm662 = vcmp.ge.f32.partialorder %v659, 0.0
    %v663 = vmul.f32 %v659, 0.2
    %v664 = vsel %vm662, %v659, %v663
    %v665 = vld [vmem:[%s4] sm:$0xff]
    %v666 = vld [vmem:[%s4 + $0x8] sm:$0xff]
    %v667 = vld [vmem:[%s4 + $0x10] sm:$0xff]
    %v668 = vld [vmem:[%s4 + $0x18] sm:$0xff]
    %v669 = vld [vmem:[%s4 + $0x20] sm:$0xff]
    %v670 = vld [vmem:[%s4 + $0x28] sm:$0xff]
    %v671 = vld [vmem:[%s4 + $0x30] sm:$0xff]
    %v672 = vld [vmem:[%s4 + $0x38] sm:$0xff]
    %v674 = vsel %vm43, %v664, 0
    %676 = vmatprep.subr.mxu0 0.0
    %677 = vmatpush1.msra.mxu0 0.0
    %678 = vmatprep.subr.mxu0 0.0
    %679 = vmatpush1.msra.mxu0 0.0
    %680 = vmatprep.subr.mxu0 0.0
    %681 = vmatpush1.msra.mxu0 0.0
    %682 = vmatprep.subr.mxu0 0.0
    %683 = vmatpush1.msra.mxu0 0.0
    %684 = vmatprep.subr.mxu0 0.0
    %685 = vmatpush1.msra.mxu0 0.0
    %686 = vmatprep.subr.mxu0 0.0
    %687 = vmatpush1.msra.mxu0 0.0
    %688 = vmatprep.subr.mxu0 0.0
    %689 = vmatpush1.msra.mxu0 0.0
    %690 = vmatprep.subr.mxu0 0.0
    %691 = vmatpush1.msra.mxu0 0.0
    %692 = vmatprep.subr.mxu0 0.0
    %693 = vmatpush1.msra.mxu0 0.0
    %694 = vmatprep.subr.mxu0 0.0
    %695 = vmatpush1.msra.mxu0 0.0
    %696 = vmatprep.subr.mxu0 0.0
    %697 = vmatpush1.msra.mxu0 0.0
    %698 = vmatprep.subr.mxu0 0.0
    %699 = vmatpush1.msra.mxu0 0.0
    %700 = vmatprep.subr.mxu0 %v672
    %701 = vmatpush1.msra.mxu0 %v671
    %702 = vmatprep.subr.mxu0 %v670
    %703 = vmatpush1.msra.mxu0 %v669
    %704 = vmatprep.subr.mxu0 %v668
    %705 = vmatpush1.msra.mxu0 %v667
    %706 = vmatprep.subr.mxu0 %v666
    %707 = vmatpush1.msra.mxu0 %v665
    %708 = vmatprep.subr.mxu0 0.0
    %709 = vmatpush2.msra.mxu0 0.0
    %710 = vmatprep.subr.mxu0 0.0
    %711 = vmatpush2.msra.mxu0 0.0
    %712 = vmatprep.subr.mxu0 0.0
    %713 = vmatpush2.msra.mxu0 0.0
    %714 = vmatprep.subr.mxu0 0.0
    %715 = vmatpush2.msra.mxu0 0.0
    %716 = vmatprep.subr.mxu0 0.0
    %717 = vmatpush2.msra.mxu0 0.0
    %718 = vmatprep.subr.mxu0 0.0
    %719 = vmatpush2.msra.mxu0 0.0
    %720 = vmatprep.subr.mxu0 0.0
    %721 = vmatpush2.msra.mxu0 0.0
    %722 = vmatprep.subr.mxu0 0.0
    %723 = vmatpush2.msra.mxu0 0.0
    %724 = vmatprep.subr.mxu0 0.0
    %725 = vmatpush2.msra.mxu0 0.0
    %726 = vmatprep.subr.mxu0 0.0
    %727 = vmatpush2.msra.mxu0 0.0
    %728 = vmatprep.subr.mxu0 0.0
    %729 = vmatpush2.msra.mxu0 0.0
    %730 = vmatprep.subr.mxu0 0.0
    %731 = vmatpush2.msra.mxu0 0.0
    %732 = vmatprep.subr.mxu0 0.0
    %733 = vmatpush2.msra.mxu0 0.0
    %734 = vmatprep.subr.mxu0 0.0
    %735 = vmatpush2.msra.mxu0 0.0
    %736 = vmatprep.subr.mxu0 0.0
    %737 = vmatpush2.msra.mxu0 0.0
    %738 = vmatprep.subr.mxu0 0.0
    %739 = vmatpush2.msra.mxu0 0.0
    %740 = vmatprep.mubr.f32.mxu0 0.0
    %741 = vmatmul.mubr.f32.gmra.mxu0 %v674
    %v742 = vpop.f32.mrf.mxu0
    %v743 = vadd.f32 0.0, %v742
    %v744 = vpop.f32.mrf.mxu0
    %v745 = vadd.f32 0.0, %v744
    %746 = vdwg.mxu0
    %v748 = vsel %vm43, %v36, 0
    %750 = vmatprep.subr.mxu0 0.0
    %751 = vmatpush1.msra.mxu0 0.0
    %752 = vmatprep.subr.mxu0 0.0
    %753 = vmatpush1.msra.mxu0 0.0
    %754 = vmatprep.subr.mxu0 0.0
    %755 = vmatpush1.msra.mxu0 0.0
    %756 = vmatprep.subr.mxu0 0.0
    %757 = vmatpush1.msra.mxu0 0.0
    %758 = vmatprep.subr.mxu0 0.0
    %759 = vmatpush1.msra.mxu0 0.0
    %760 = vmatprep.subr.mxu0 0.0
    %761 = vmatpush1.msra.mxu0 0.0
    %762 = vmatprep.subr.mxu0 0.0
    %763 = vmatpush1.msra.mxu0 0.0
    %764 = vmatprep.subr.mxu0 0.0
    %765 = vmatpush1.msra.mxu0 0.0
    %766 = vmatprep.subr.mxu0 0.0
    %767 = vmatpush1.msra.mxu0 0.0
    %768 = vmatprep.subr.mxu0 0.0
    %769 = vmatpush1.msra.mxu0 0.0
    %770 = vmatprep.subr.mxu0 0.0
    %771 = vmatpush1.msra.mxu0 0.0
    %772 = vmatprep.subr.mxu0 0.0
    %773 = vmatpush1.msra.mxu0 0.0
    %774 = vmatprep.subr.mxu0 %v672
    %775 = vmatpush1.msra.mxu0 %v671
    %776 = vmatprep.subr.mxu0 %v670
    %777 = vmatpush1.msra.mxu0 %v669
    %778 = vmatprep.subr.mxu0 %v668
    %779 = vmatpush1.msra.mxu0 %v667
    %780 = vmatprep.subr.mxu0 %v666
    %781 = vmatpush1.msra.mxu0 %v665
    %782 = vmatprep.subr.mxu0 0.0
    %783 = vmatpush2.msra.mxu0 0.0
    %784 = vmatprep.subr.mxu0 0.0
    %785 = vmatpush2.msra.mxu0 0.0
    %786 = vmatprep.subr.mxu0 0.0
    %787 = vmatpush2.msra.mxu0 0.0
    %788 = vmatprep.subr.mxu0 0.0
    %789 = vmatpush2.msra.mxu0 0.0
    %790 = vmatprep.subr.mxu0 0.0
    %791 = vmatpush2.msra.mxu0 0.0
    %792 = vmatprep.subr.mxu0 0.0
    %793 = vmatpush2.msra.mxu0 0.0
    %794 = vmatprep.subr.mxu0 0.0
    %795 = vmatpush2.msra.mxu0 0.0
    %796 = vmatprep.subr.mxu0 0.0
    %797 = vmatpush2.msra.mxu0 0.0
    %798 = vmatprep.subr.mxu0 0.0
    %799 = vmatpush2.msra.mxu0 0.0
    %800 = vmatprep.subr.mxu0 0.0
    %801 = vmatpush2.msra.mxu0 0.0
    %802 = vmatprep.subr.mxu0 0.0
    %803 = vmatpush2.msra.mxu0 0.0
    %804 = vmatprep.subr.mxu0 0.0
    %805 = vmatpush2.msra.mxu0 0.0
    %806 = vmatprep.subr.mxu0 0.0
    %807 = vmatpush2.msra.mxu0 0.0
    %808 = vmatprep.subr.mxu0 0.0
    %809 = vmatpush2.msra.mxu0 0.0
    %810 = vmatprep.subr.mxu0 0.0
    %811 = vmatpush2.msra.mxu0 0.0
    %812 = vmatprep.subr.mxu0 0.0
    %813 = vmatpush2.msra.mxu0 0.0
    %814 = vmatprep.mubr.f32.mxu0 0.0
    %815 = vmatmul.mubr.f32.gmra.mxu0 %v748
    %v816 = vpop.f32.mrf.mxu0
    %v817 = vadd.f32 0.0, %v816
    %v818 = vpop.f32.mrf.mxu0
    %v819 = vadd.f32 0.0, %v818
    %820 = vdwg.mxu0
    %v821 = vld [vmem:[#allocation2] sm:$0xff]
    %v822 = vld [vmem:[#allocation2 + $0x8] sm:$0xff]
    %v823 = vld [vmem:[#allocation2 + $0x10] sm:$0xff]
    %v824 = vld [vmem:[#allocation2 + $0x18] sm:$0xff]
    %v825 = vld [vmem:[#allocation2 + $0x20] sm:$0xff]
    %v826 = vld [vmem:[#allocation2 + $0x28] sm:$0xff]
    %v827 = vld [vmem:[#allocation2 + $0x30] sm:$0xff]
    %v828 = vld [vmem:[#allocation2 + $0x38] sm:$0xff]
    %v829 = vld [vmem:[#allocation2 + $0x40] sm:$0xff]
    %v830 = vld [vmem:[#allocation2 + $0x48] sm:$0xff]
    %v831 = vld [vmem:[#allocation2 + $0x50] sm:$0xff]
    %v832 = vld [vmem:[#allocation2 + $0x58] sm:$0xff]
    %v833 = vld [vmem:[#allocation2 + $0x60] sm:$0xff]
    %v834 = vld [vmem:[#allocation2 + $0x68] sm:$0xff]
    %v835 = vld [vmem:[#allocation2 + $0x70] sm:$0xff]
    %v836 = vld [vmem:[#allocation2 + $0x78] sm:$0xff]
    %v837 = vadd.f32 %v743, %v745
    %vm838 = vcmp.ge.f32.partialorder %v837, 0.0
    %v839 = vmul.f32 %v837, 0.2
    %v840 = vsel %vm838, %v837, %v839
    %841 = vmatprep.subr.mxu0 0.0
    %842 = vmatpush1.msra.mxu0 %v836
    %843 = vmatprep.subr.mxu0 0.0
    %844 = vmatpush1.msra.mxu0 %v835
    %845 = vmatprep.subr.mxu0 0.0
    %846 = vmatpush1.msra.mxu0 %v834
    %847 = vmatprep.subr.mxu0 0.0
    %848 = vmatpush1.msra.mxu0 %v833
    %849 = vmatprep.subr.mxu0 0.0
    %850 = vmatpush1.msra.mxu0 %v832
    %851 = vmatprep.subr.mxu0 0.0
    %852 = vmatpush1.msra.mxu0 %v831
    %853 = vmatprep.subr.mxu0 0.0
    %854 = vmatpush1.msra.mxu0 %v830
    %855 = vmatprep.subr.mxu0 0.0
    %856 = vmatpush1.msra.mxu0 %v829
    %857 = vmatprep.subr.mxu0 0.0
    %858 = vmatpush1.msra.mxu0 %v828
    %859 = vmatprep.subr.mxu0 0.0
    %860 = vmatpush1.msra.mxu0 %v827
    %861 = vmatprep.subr.mxu0 0.0
    %862 = vmatpush1.msra.mxu0 %v826
    %863 = vmatprep.subr.mxu0 0.0
    %864 = vmatpush1.msra.mxu0 %v825
    %865 = vmatprep.subr.mxu0 0.0
    %866 = vmatpush1.msra.mxu0 %v824
    %867 = vmatprep.subr.mxu0 0.0
    %868 = vmatpush1.msra.mxu0 %v823
    %869 = vmatprep.subr.mxu0 0.0
    %870 = vmatpush1.msra.mxu0 %v822
    %871 = vmatprep.subr.mxu0 0.0
    %872 = vmatpush1.msra.mxu0 %v821
    %873 = vmatprep.subr.mxu0 0.0
    %874 = vmatpush2.msra.mxu0 0.0
    %875 = vmatprep.subr.mxu0 0.0
    %876 = vmatpush2.msra.mxu0 0.0
    %877 = vmatprep.subr.mxu0 0.0
    %878 = vmatpush2.msra.mxu0 0.0
    %879 = vmatprep.subr.mxu0 0.0
    %880 = vmatpush2.msra.mxu0 0.0
    %881 = vmatprep.subr.mxu0 0.0
    %882 = vmatpush2.msra.mxu0 0.0
    %883 = vmatprep.subr.mxu0 0.0
    %884 = vmatpush2.msra.mxu0 0.0
    %885 = vmatprep.subr.mxu0 0.0
    %886 = vmatpush2.msra.mxu0 0.0
    %887 = vmatprep.subr.mxu0 0.0
    %888 = vmatpush2.msra.mxu0 0.0
    %889 = vmatprep.subr.mxu0 0.0
    %890 = vmatpush2.msra.mxu0 0.0
    %891 = vmatprep.subr.mxu0 0.0
    %892 = vmatpush2.msra.mxu0 0.0
    %893 = vmatprep.subr.mxu0 0.0
    %894 = vmatpush2.msra.mxu0 0.0
    %895 = vmatprep.subr.mxu0 0.0
    %896 = vmatpush2.msra.mxu0 0.0
    %897 = vmatprep.subr.mxu0 0.0
    %898 = vmatpush2.msra.mxu0 0.0
    %899 = vmatprep.subr.mxu0 0.0
    %900 = vmatpush2.msra.mxu0 0.0
    %901 = vmatprep.subr.mxu0 0.0
    %902 = vmatpush2.msra.mxu0 0.0
    %903 = vmatprep.subr.mxu0 0.0
    %904 = vmatpush2.msra.mxu0 0.0
    %905 = vmatprep.mubr.f32.mxu0 0.0
    %906 = vmatmul.mubr.f32.gmra.mxu0 %v840
    %v907 = vpop.f32.mrf.mxu0
    %v908 = vadd.f32 0.0, %v907
    %v909 = vpop.f32.mrf.mxu0
    %910 = vdwg.mxu0
    %v911 = vlaneseq
    %v912 = vshrl.u32 %v911, 7
    %v913 = vsub.s32 0, %v912
    %v914 = vrot.slane %v745, %v913
    %v915 = vadd.f32 %v817, %v914
    %vm916 = vcmp.ge.f32.partialorder %v915, 0.0
    %v917 = vmul.f32 %v915, 0.2
    %v918 = vsel %vm916, %v915, %v917
    %919 = vmatprep.subr.mxu0 0.0
    %920 = vmatpush1.msra.mxu0 %v836
    %921 = vmatprep.subr.mxu0 0.0
    %922 = vmatpush1.msra.mxu0 %v835
    %923 = vmatprep.subr.mxu0 0.0
    %924 = vmatpush1.msra.mxu0 %v834
    %925 = vmatprep.subr.mxu0 0.0
    %926 = vmatpush1.msra.mxu0 %v833
    %927 = vmatprep.subr.mxu0 0.0
    %928 = vmatpush1.msra.mxu0 %v832
    %929 = vmatprep.subr.mxu0 0.0
    %930 = vmatpush1.msra.mxu0 %v831
    %931 = vmatprep.subr.mxu0 0.0
    %932 = vmatpush1.msra.mxu0 %v830
    %933 = vmatprep.subr.mxu0 0.0
    %934 = vmatpush1.msra.mxu0 %v829
    %935 = vmatprep.subr.mxu0 0.0
    %936 = vmatpush1.msra.mxu0 %v828
    %937 = vmatprep.subr.mxu0 0.0
    %938 = vmatpush1.msra.mxu0 %v827
    %939 = vmatprep.subr.mxu0 0.0
    %940 = vmatpush1.msra.mxu0 %v826
    %941 = vmatprep.subr.mxu0 0.0
    %942 = vmatpush1.msra.mxu0 %v825
    %943 = vmatprep.subr.mxu0 0.0
    %944 = vmatpush1.msra.mxu0 %v824
    %945 = vmatprep.subr.mxu0 0.0
    %946 = vmatpush1.msra.mxu0 %v823
    %947 = vmatprep.subr.mxu0 0.0
    %948 = vmatpush1.msra.mxu0 %v822
    %949 = vmatprep.subr.mxu0 0.0
    %950 = vmatpush1.msra.mxu0 %v821
    %951 = vmatprep.subr.mxu0 0.0
    %952 = vmatpush2.msra.mxu0 0.0
    %953 = vmatprep.subr.mxu0 0.0
    %954 = vmatpush2.msra.mxu0 0.0
    %955 = vmatprep.subr.mxu0 0.0
    %956 = vmatpush2.msra.mxu0 0.0
    %957 = vmatprep.subr.mxu0 0.0
    %958 = vmatpush2.msra.mxu0 0.0
    %959 = vmatprep.subr.mxu0 0.0
    %960 = vmatpush2.msra.mxu0 0.0
    %961 = vmatprep.subr.mxu0 0.0
    %962 = vmatpush2.msra.mxu0 0.0
    %963 = vmatprep.subr.mxu0 0.0
    %964 = vmatpush2.msra.mxu0 0.0
    %965 = vmatprep.subr.mxu0 0.0
    %966 = vmatpush2.msra.mxu0 0.0
    %967 = vmatprep.subr.mxu0 0.0
    %968 = vmatpush2.msra.mxu0 0.0
    %969 = vmatprep.subr.mxu0 0.0
    %970 = vmatpush2.msra.mxu0 0.0
    %971 = vmatprep.subr.mxu0 0.0
    %972 = vmatpush2.msra.mxu0 0.0
    %973 = vmatprep.subr.mxu0 0.0
    %974 = vmatpush2.msra.mxu0 0.0
    %975 = vmatprep.subr.mxu0 0.0
    %976 = vmatpush2.msra.mxu0 0.0
    %977 = vmatprep.subr.mxu0 0.0
    %978 = vmatpush2.msra.mxu0 0.0
    %979 = vmatprep.subr.mxu0 0.0
    %980 = vmatpush2.msra.mxu0 0.0
    %981 = vmatprep.subr.mxu0 0.0
    %982 = vmatpush2.msra.mxu0 0.0
    %983 = vmatprep.mubr.f32.mxu0 0.0
    %984 = vmatmul.mubr.f32.gmra.mxu0 %v918
    %v985 = vpop.f32.mrf.mxu0
    %v986 = vadd.f32 0.0, %v985
    %v987 = vpop.f32.mrf.mxu0
    %988 = vdwg.mxu0
    %vm989 = vcmask 1043456
    %v990 = vsel %vm989, %v986, -inf
    %v991 = vrot.slane %v990, 4
    %v992 = vmax.f32 %v990, %v991
    %v993 = vrot.slane %v992, 2
    %v994 = vmax.f32 %v992, %v993
    %v995 = vrot.slane %v994, 1
    %v996 = vmax.f32 %v994, %v995
    %v997 = vmax.f32 %v908, %v996
    %v998 = vsub.f32 %v908, %v997
    %v999 = vmul.f32 %v998, 1.442695
    %v1000 = vpow.pop %v999
    %v1001 = vlaneseq
    %v1002 = vshrl.u32 %v1001, 7
    %v1003 = vsub.s32 0, %v1002
    %v1004 = vrot.slane %v997, %v1003
    %v1005 = vsub.f32 %v986, %v1004
    %v1006 = vmul.f32 %v1005, 1.442695
    %v1007 = vpow.pop %v1006
    %v1008 = vsel %vm989, %v1007, 0.0
    %v1009 = vrot.slane %v1008, 4
    %v1010 = vadd.f32 %v1008, %v1009
    %v1011 = vrot.slane %v1010, 2
    %v1012 = vadd.f32 %v1010, %v1011
    %v1013 = vrot.slane %v1012, 1
    %v1014 = vadd.f32 %v1012, %v1013
    %v1015 = vadd.f32 %v1000, %v1014
    %v1016 = vrcp.pop %v1015
    %v1017 = vmul.f32 %v1000, %v745
    %v1018 = vmul.f32 %v1007, %v819
    %v1019 = vsel %vm989, %v1018, 0.0
    %v1020 = vrot.slane %v1019, 4
    %v1021 = vadd.f32 %v1019, %v1020
    %v1022 = vrot.slane %v1021, 2
    %v1023 = vadd.f32 %v1021, %v1022
    %v1024 = vrot.slane %v1023, 1
    %v1025 = vadd.f32 %v1023, %v1024
    %v1026 = vadd.f32 %v1017, %v1025
    %v1027 = vmul.f32 %v1026, %v1016
    %v1028 = vld [vmem:[#allocation2 + $0x100] sm:$0xff]
    %v1029 = vld [vmem:[#allocation2 + $0x108] sm:$0xff]
    %v1030 = vld [vmem:[#allocation2 + $0x110] sm:$0xff]
    %v1031 = vld [vmem:[#allocation2 + $0x118] sm:$0xff]
    %v1032 = vld [vmem:[#allocation2 + $0x80] sm:$0xff]
    %v1033 = vld [vmem:[#allocation2 + $0x88] sm:$0xff]
    %v1034 = vld [vmem:[#allocation2 + $0x90] sm:$0xff]
    %v1035 = vld [vmem:[#allocation2 + $0x98] sm:$0xff]
    %v1036 = vld [vmem:[#allocation2 + $0xa0] sm:$0xff]
    %v1037 = vld [vmem:[#allocation2 + $0xa8] sm:$0xff]
    %v1038 = vld [vmem:[#allocation2 + $0xb0] sm:$0xff]
    %v1039 = vld [vmem:[#allocation2 + $0xb8] sm:$0xff]
    %v1040 = vld [vmem:[#allocation2 + $0xc0] sm:$0xff]
    %v1041 = vld [vmem:[#allocation2 + $0xc8] sm:$0xff]
    %v1042 = vld [vmem:[#allocation2 + $0xd0] sm:$0xff]
    %v1043 = vld [vmem:[#allocation2 + $0xd8] sm:$0xff]
    %v1044 = vld [vmem:[#allocation2 + $0xe0] sm:$0xff]
    %v1045 = vld [vmem:[#allocation2 + $0xe8] sm:$0xff]
    %v1046 = vld [vmem:[#allocation2 + $0xf0] sm:$0xff]
    %v1047 = vld [vmem:[#allocation2 + $0xf8] sm:$0xff]
    %1048 = vmatprep.subr.mxu0 0.0
    %1049 = vmatpush1.msra.mxu0 %v1047
    %1050 = vmatprep.subr.mxu0 0.0
    %1051 = vmatpush1.msra.mxu0 %v1046
    %1052 = vmatprep.subr.mxu0 0.0
    %1053 = vmatpush1.msra.mxu0 %v1045
    %1054 = vmatprep.subr.mxu0 0.0
    %1055 = vmatpush1.msra.mxu0 %v1044
    %1056 = vmatprep.subr.mxu0 0.0
    %1057 = vmatpush1.msra.mxu0 %v1043
    %1058 = vmatprep.subr.mxu0 0.0
    %1059 = vmatpush1.msra.mxu0 %v1042
    %1060 = vmatprep.subr.mxu0 0.0
    %1061 = vmatpush1.msra.mxu0 %v1041
    %1062 = vmatprep.subr.mxu0 0.0
    %1063 = vmatpush1.msra.mxu0 %v1040
    %1064 = vmatprep.subr.mxu0 0.0
    %1065 = vmatpush1.msra.mxu0 %v1039
    %1066 = vmatprep.subr.mxu0 0.0
    %1067 = vmatpush1.msra.mxu0 %v1038
    %1068 = vmatprep.subr.mxu0 0.0
    %1069 = vmatpush1.msra.mxu0 %v1037
    %1070 = vmatprep.subr.mxu0 0.0
    %1071 = vmatpush1.msra.mxu0 %v1036
    %1072 = vmatprep.subr.mxu0 0.0
    %1073 = vmatpush1.msra.mxu0 %v1035
    %1074 = vmatprep.subr.mxu0 0.0
    %1075 = vmatpush1.msra.mxu0 %v1034
    %1076 = vmatprep.subr.mxu0 0.0
    %1077 = vmatpush1.msra.mxu0 %v1033
    %1078 = vmatprep.subr.mxu0 0.0
    %1079 = vmatpush1.msra.mxu0 %v1032
    %1080 = vmatprep.subr.mxu0 0.0
    %1081 = vmatpush2.msra.mxu0 0.0
    %1082 = vmatprep.subr.mxu0 0.0
    %1083 = vmatpush2.msra.mxu0 0.0
    %1084 = vmatprep.subr.mxu0 0.0
    %1085 = vmatpush2.msra.mxu0 0.0
    %1086 = vmatprep.subr.mxu0 0.0
    %1087 = vmatpush2.msra.mxu0 0.0
    %1088 = vmatprep.subr.mxu0 0.0
    %1089 = vmatpush2.msra.mxu0 0.0
    %1090 = vmatprep.subr.mxu0 0.0
    %1091 = vmatpush2.msra.mxu0 0.0
    %1092 = vmatprep.subr.mxu0 0.0
    %1093 = vmatpush2.msra.mxu0 0.0
    %1094 = vmatprep.subr.mxu0 0.0
    %1095 = vmatpush2.msra.mxu0 0.0
    %1096 = vmatprep.subr.mxu0 0.0
    %1097 = vmatpush2.msra.mxu0 0.0
    %1098 = vmatprep.subr.mxu0 0.0
    %1099 = vmatpush2.msra.mxu0 0.0
    %1100 = vmatprep.subr.mxu0 0.0
    %1101 = vmatpush2.msra.mxu0 0.0
    %1102 = vmatprep.subr.mxu0 0.0
    %1103 = vmatpush2.msra.mxu0 0.0
    %1104 = vmatprep.subr.mxu0 0.0
    %1105 = vmatpush2.msra.mxu0 0.0
    %1106 = vmatprep.subr.mxu0 0.0
    %1107 = vmatpush2.msra.mxu0 0.0
    %1108 = vmatprep.subr.mxu0 0.0
    %1109 = vmatpush2.msra.mxu0 0.0
    %1110 = vmatprep.subr.mxu0 0.0
    %1111 = vmatpush2.msra.mxu0 0.0
    %1112 = vmatprep.mubr.f32.mxu0 0.0
    %1113 = vmatmul.mubr.f32.gmra.mxu0 %v1027
    %v1114 = vpop.f32.mrf.mxu0
    %v1115 = vadd.f32 0.0, %v1114
    %v1116 = vpop.f32.mrf.mxu0
    %1117 = vdwg.mxu0
    %v1118 = vlaneseq
    %v1119 = vshrl.u32 %v1118, 7
    %v1120 = vsub.s32 0, %v1119
    %v1121 = vrot.slane %v1115, %v1120
    %1122 = vmatprep.subr.mxu0 0.0
    %1123 = vmatpush1.msra.mxu0 0.0
    %1124 = vmatprep.subr.mxu0 0.0
    %1125 = vmatpush1.msra.mxu0 0.0
    %1126 = vmatprep.subr.mxu0 0.0
    %1127 = vmatpush1.msra.mxu0 0.0
    %1128 = vmatprep.subr.mxu0 0.0
    %1129 = vmatpush1.msra.mxu0 0.0
    %1130 = vmatprep.subr.mxu0 0.0
    %1131 = vmatpush1.msra.mxu0 0.0
    %1132 = vmatprep.subr.mxu0 0.0
    %1133 = vmatpush1.msra.mxu0 0.0
    %1134 = vmatprep.subr.mxu0 0.0
    %1135 = vmatpush1.msra.mxu0 0.0
    %1136 = vmatprep.subr.mxu0 0.0
    %1137 = vmatpush1.msra.mxu0 0.0
    %1138 = vmatprep.subr.mxu0 0.0
    %1139 = vmatpush1.msra.mxu0 0.0
    %1140 = vmatprep.subr.mxu0 0.0
    %1141 = vmatpush1.msra.mxu0 0.0
    %1142 = vmatprep.subr.mxu0 0.0
    %1143 = vmatpush1.msra.mxu0 0.0
    %1144 = vmatprep.subr.mxu0 0.0
    %1145 = vmatpush1.msra.mxu0 0.0
    %1146 = vmatprep.subr.mxu0 0.0
    %1147 = vmatpush1.msra.mxu0 %v1031
    %1148 = vmatprep.subr.mxu0 0.0
    %1149 = vmatpush1.msra.mxu0 %v1030
    %1150 = vmatprep.subr.mxu0 0.0
    %1151 = vmatpush1.msra.mxu0 %v1029
    %1152 = vmatprep.subr.mxu0 0.0
    %1153 = vmatpush1.msra.mxu0 %v1028
    %1154 = vmatprep.subr.mxu0 0.0
    %1155 = vmatpush2.msra.mxu0 0.0
    %1156 = vmatprep.subr.mxu0 0.0
    %1157 = vmatpush2.msra.mxu0 0.0
    %1158 = vmatprep.subr.mxu0 0.0
    %1159 = vmatpush2.msra.mxu0 0.0
    %1160 = vmatprep.subr.mxu0 0.0
    %1161 = vmatpush2.msra.mxu0 0.0
    %1162 = vmatprep.subr.mxu0 0.0
    %1163 = vmatpush2.msra.mxu0 0.0
    %1164 = vmatprep.subr.mxu0 0.0
    %1165 = vmatpush2.msra.mxu0 0.0
    %1166 = vmatprep.subr.mxu0 0.0
    %1167 = vmatpush2.msra.mxu0 0.0
    %1168 = vmatprep.subr.mxu0 0.0
    %1169 = vmatpush2.msra.mxu0 0.0
    %1170 = vmatprep.subr.mxu0 0.0
    %1171 = vmatpush2.msra.mxu0 0.0
    %1172 = vmatprep.subr.mxu0 0.0
    %1173 = vmatpush2.msra.mxu0 0.0
    %1174 = vmatprep.subr.mxu0 0.0
    %1175 = vmatpush2.msra.mxu0 0.0
    %1176 = vmatprep.subr.mxu0 0.0
    %1177 = vmatpush2.msra.mxu0 0.0
    %1178 = vmatprep.subr.mxu0 0.0
    %1179 = vmatpush2.msra.mxu0 0.0
    %1180 = vmatprep.subr.mxu0 0.0
    %1181 = vmatpush2.msra.mxu0 0.0
    %1182 = vmatprep.subr.mxu0 0.0
    %1183 = vmatpush2.msra.mxu0 0.0
    %1184 = vmatprep.subr.mxu0 0.0
    %1185 = vmatpush2.msra.mxu0 0.0
    %1186 = vmatprep.mubr.f32.mxu0 0.0
    %1187 = vmatmul.mubr.f32.gmra.mxu0 %v748
    %v1188 = vpop.f32.mrf.mxu0
    %v1189 = vadd.f32 %v1121, %v1188
    %v1190 = vpop.f32.mrf.mxu0
    %1191 = vdwg.mxu0
    %v1192 = vld [vmem:[#allocation2 + $0x120] sm:$0x1]
    %v1193 = vlaneseq
    %v1194 = vshrl.u32 %v1193, 7
    %v1195 = vsub.s32 0, %v1194
    %v1196 = vrot.slane %v1192, %v1195
    %v1197 = vadd.f32 %v1189, %v1196
    %vm1198 = vcmp.ge.f32.partialorder %v1197, 0.0
    %v1199 = vmul.f32 %v1197, 0.2
    %v1200 = vsel %vm1198, %v1197, %v1199
    %v1201 = vld [vmem:[#allocation2 + $0x128] sm:$0xff]
    %v1202 = vld [vmem:[#allocation2 + $0x130] sm:$0xff]
    %v1203 = vld [vmem:[#allocation2 + $0x138] sm:$0xff]
    %v1204 = vld [vmem:[#allocation2 + $0x140] sm:$0xff]
    %v1205 = vld [vmem:[#allocation2 + $0x148] sm:$0xff]
    %v1206 = vld [vmem:[#allocation2 + $0x150] sm:$0xff]
    %v1207 = vld [vmem:[#allocation2 + $0x158] sm:$0xff]
    %v1208 = vld [vmem:[#allocation2 + $0x160] sm:$0xff]
    %v1209 = vld [vmem:[#allocation2 + $0x168] sm:$0xff]
    %v1210 = vld [vmem:[#allocation2 + $0x170] sm:$0xff]
    %v1211 = vld [vmem:[#allocation2 + $0x178] sm:$0xff]
    %v1212 = vld [vmem:[#allocation2 + $0x180] sm:$0xff]
    %v1213 = vld [vmem:[#allocation2 + $0x188] sm:$0xff]
    %v1214 = vld [vmem:[#allocation2 + $0x190] sm:$0xff]
    %v1215 = vld [vmem:[#allocation2 + $0x198] sm:$0xff]
    %v1216 = vld [vmem:[#allocation2 + $0x1a0] sm:$0xff]
    %v1217 = vld [vmem:[#allocation2 + $0x1a8] sm:$0x1]
    %v1218 = vlaneseq
    %v1219 = vshrl.u32 %v1218, 7
    %v1220 = vsub.s32 0, %v1219
    %v1221 = vrot.slane %v1217, %v1220
    %1222 = vmatprep.subr.mxu0 0.0
    %1223 = vmatpush1.msra.mxu0 %v1216
    %1224 = vmatprep.subr.mxu0 0.0
    %1225 = vmatpush1.msra.mxu0 %v1215
    %1226 = vmatprep.subr.mxu0 0.0
    %1227 = vmatpush1.msra.mxu0 %v1214
    %1228 = vmatprep.subr.mxu0 0.0
    %1229 = vmatpush1.msra.mxu0 %v1213
    %1230 = vmatprep.subr.mxu0 0.0
    %1231 = vmatpush1.msra.mxu0 %v1212
    %1232 = vmatprep.subr.mxu0 0.0
    %1233 = vmatpush1.msra.mxu0 %v1211
    %1234 = vmatprep.subr.mxu0 0.0
    %1235 = vmatpush1.msra.mxu0 %v1210
    %1236 = vmatprep.subr.mxu0 0.0
    %1237 = vmatpush1.msra.mxu0 %v1209
    %1238 = vmatprep.subr.mxu0 0.0
    %1239 = vmatpush1.msra.mxu0 %v1208
    %1240 = vmatprep.subr.mxu0 0.0
    %1241 = vmatpush1.msra.mxu0 %v1207
    %1242 = vmatprep.subr.mxu0 0.0
    %1243 = vmatpush1.msra.mxu0 %v1206
    %1244 = vmatprep.subr.mxu0 0.0
    %1245 = vmatpush1.msra.mxu0 %v1205
    %1246 = vmatprep.subr.mxu0 0.0
    %1247 = vmatpush1.msra.mxu0 %v1204
    %1248 = vmatprep.subr.mxu0 0.0
    %1249 = vmatpush1.msra.mxu0 %v1203
    %1250 = vmatprep.subr.mxu0 0.0
    %1251 = vmatpush1.msra.mxu0 %v1202
    %1252 = vmatprep.subr.mxu0 0.0
    %1253 = vmatpush1.msra.mxu0 %v1201
    %1254 = vmatprep.subr.mxu0 0.0
    %1255 = vmatpush2.msra.mxu0 0.0
    %1256 = vmatprep.subr.mxu0 0.0
    %1257 = vmatpush2.msra.mxu0 0.0
    %1258 = vmatprep.subr.mxu0 0.0
    %1259 = vmatpush2.msra.mxu0 0.0
    %1260 = vmatprep.subr.mxu0 0.0
    %1261 = vmatpush2.msra.mxu0 0.0
    %1262 = vmatprep.subr.mxu0 0.0
    %1263 = vmatpush2.msra.mxu0 0.0
    %1264 = vmatprep.subr.mxu0 0.0
    %1265 = vmatpush2.msra.mxu0 0.0
    %1266 = vmatprep.subr.mxu0 0.0
    %1267 = vmatpush2.msra.mxu0 0.0
    %1268 = vmatprep.subr.mxu0 0.0
    %1269 = vmatpush2.msra.mxu0 0.0
    %1270 = vmatprep.subr.mxu0 0.0
    %1271 = vmatpush2.msra.mxu0 0.0
    %1272 = vmatprep.subr.mxu0 0.0
    %1273 = vmatpush2.msra.mxu0 0.0
    %1274 = vmatprep.subr.mxu0 0.0
    %1275 = vmatpush2.msra.mxu0 0.0
    %1276 = vmatprep.subr.mxu0 0.0
    %1277 = vmatpush2.msra.mxu0 0.0
    %1278 = vmatprep.subr.mxu0 0.0
    %1279 = vmatpush2.msra.mxu0 0.0
    %1280 = vmatprep.subr.mxu0 0.0
    %1281 = vmatpush2.msra.mxu0 0.0
    %1282 = vmatprep.subr.mxu0 0.0
    %1283 = vmatpush2.msra.mxu0 0.0
    %1284 = vmatprep.subr.mxu0 0.0
    %1285 = vmatpush2.msra.mxu0 0.0
    %1286 = vmatprep.mubr.f32.mxu0 0.0
    %1287 = vmatmul.mubr.f32.gmra.mxu0 %v1200
    %v1288 = vpop.f32.mrf.mxu0
    %v1289 = vadd.f32 %v1221, %v1288
    %v1290 = vpop.f32.mrf.mxu0
    %1291 = vdwg.mxu0
    %vm1292 = vcmp.ge.f32.partialorder %v1289, 0.0
    %v1293 = vmul.f32 %v1289, 0.2
    %v1294 = vsel %vm1292, %v1289, %v1293
    %v1295 = vld [vmem:[#allocation2 + $0x1b0] sm:$0xff]
    %v1296 = vld [vmem:[#allocation2 + $0x1b8] sm:$0xff]
    %v1297 = vld [vmem:[#allocation2 + $0x1c0] sm:$0xff]
    %v1298 = vld [vmem:[#allocation2 + $0x1c8] sm:$0xff]
    %v1299 = vld [vmem:[#allocation2 + $0x1d0] sm:$0xff]
    %v1300 = vld [vmem:[#allocation2 + $0x1d8] sm:$0xff]
    %v1301 = vld [vmem:[#allocation2 + $0x1e0] sm:$0xff]
    %v1302 = vld [vmem:[#allocation2 + $0x1e8] sm:$0xff]
    %v1303 = vld [vmem:[#allocation2 + $0x1f0] sm:$0xff]
    %v1304 = vld [vmem:[#allocation2 + $0x1f8] sm:$0xff]
    %v1305 = vld [vmem:[#allocation2 + $0x200] sm:$0xff]
    %v1306 = vld [vmem:[#allocation2 + $0x208] sm:$0xff]
    %v1307 = vld [vmem:[#allocation2 + $0x210] sm:$0xff]
    %v1308 = vld [vmem:[#allocation2 + $0x218] sm:$0xff]
    %v1309 = vld [vmem:[#allocation2 + $0x220] sm:$0xff]
    %v1310 = vld [vmem:[#allocation2 + $0x228] sm:$0xff]
    %v1311 = vld [vmem:[#allocation2 + $0x230] sm:$0x1]
    %v1312 = vlaneseq
    %v1313 = vshrl.u32 %v1312, 7
    %v1314 = vsub.s32 0, %v1313
    %v1315 = vrot.slane %v1311, %v1314
    %1316 = vmatprep.subr.mxu0 0.0
    %1317 = vmatpush1.msra.mxu0 %v1310
    %1318 = vmatprep.subr.mxu0 0.0
    %1319 = vmatpush1.msra.mxu0 %v1309
    %1320 = vmatprep.subr.mxu0 0.0
    %1321 = vmatpush1.msra.mxu0 %v1308
    %1322 = vmatprep.subr.mxu0 0.0
    %1323 = vmatpush1.msra.mxu0 %v1307
    %1324 = vmatprep.subr.mxu0 0.0
    %1325 = vmatpush1.msra.mxu0 %v1306
    %1326 = vmatprep.subr.mxu0 0.0
    %1327 = vmatpush1.msra.mxu0 %v1305
    %1328 = vmatprep.subr.mxu0 0.0
    %1329 = vmatpush1.msra.mxu0 %v1304
    %1330 = vmatprep.subr.mxu0 0.0
    %1331 = vmatpush1.msra.mxu0 %v1303
    %1332 = vmatprep.subr.mxu0 0.0
    %1333 = vmatpush1.msra.mxu0 %v1302
    %1334 = vmatprep.subr.mxu0 0.0
    %1335 = vmatpush1.msra.mxu0 %v1301
    %1336 = vmatprep.subr.mxu0 0.0
    %1337 = vmatpush1.msra.mxu0 %v1300
    %1338 = vmatprep.subr.mxu0 0.0
    %1339 = vmatpush1.msra.mxu0 %v1299
    %1340 = vmatprep.subr.mxu0 0.0
    %1341 = vmatpush1.msra.mxu0 %v1298
    %1342 = vmatprep.subr.mxu0 0.0
    %1343 = vmatpush1.msra.mxu0 %v1297
    %1344 = vmatprep.subr.mxu0 0.0
    %1345 = vmatpush1.msra.mxu0 %v1296
    %1346 = vmatprep.subr.mxu0 0.0
    %1347 = vmatpush1.msra.mxu0 %v1295
    %1348 = vmatprep.subr.mxu0 0.0
    %1349 = vmatpush2.msra.mxu0 0.0
    %1350 = vmatprep.subr.mxu0 0.0
    %1351 = vmatpush2.msra.mxu0 0.0
    %1352 = vmatprep.subr.mxu0 0.0
    %1353 = vmatpush2.msra.mxu0 0.0
    %1354 = vmatprep.subr.mxu0 0.0
    %1355 = vmatpush2.msra.mxu0 0.0
    %1356 = vmatprep.subr.mxu0 0.0
    %1357 = vmatpush2.msra.mxu0 0.0
    %1358 = vmatprep.subr.mxu0 0.0
    %1359 = vmatpush2.msra.mxu0 0.0
    %1360 = vmatprep.subr.mxu0 0.0
    %1361 = vmatpush2.msra.mxu0 0.0
    %1362 = vmatprep.subr.mxu0 0.0
    %1363 = vmatpush2.msra.mxu0 0.0
    %1364 = vmatprep.subr.mxu0 0.0
    %1365 = vmatpush2.msra.mxu0 0.0
    %1366 = vmatprep.subr.mxu0 0.0
    %1367 = vmatpush2.msra.mxu0 0.0
    %1368 = vmatprep.subr.mxu0 0.0
    %1369 = vmatpush2.msra.mxu0 0.0
    %1370 = vmatprep.subr.mxu0 0.0
    %1371 = vmatpush2.msra.mxu0 0.0
    %1372 = vmatprep.subr.mxu0 0.0
    %1373 = vmatpush2.msra.mxu0 0.0
    %1374 = vmatprep.subr.mxu0 0.0
    %1375 = vmatpush2.msra.mxu0 0.0
    %1376 = vmatprep.subr.mxu0 0.0
    %1377 = vmatpush2.msra.mxu0 0.0
    %1378 = vmatprep.subr.mxu0 0.0
    %1379 = vmatpush2.msra.mxu0 0.0
    %1380 = vmatprep.mubr.f32.mxu0 0.0
    %1381 = vmatmul.mubr.f32.gmra.mxu0 %v1294
    %v1382 = vpop.f32.mrf.mxu0
    %v1383 = vadd.f32 %v1315, %v1382
    %v1384 = vpop.f32.mrf.mxu0
    %1385 = vdwg.mxu0
    %v1386 = vand.u32 2147483647, %v1383
    %v1387 = vsub.f32 0.0, %v1386
    %v1388 = vmul.f32 %v1387, 1.442695
    %v1389 = vpow.pop %v1388
    %v1390 = vadd.f32 %v1389, 1.0
    %v1391 = vrcp.pop %v1390
    %v1392 = vmul.f32 1.0, %v1391
    %vm1393 = vcmp.ge.f32.partialorder %v1383, 0.0
    %v1394 = vmul.f32 %v1389, %v1392
    %v1395 = vsel %vm1393, %v1392, %v1394
    %vm1396 = vcmask 19456
    %1397 = vst.msk [vmem:[#allocation5] sm:$0xf] %vm1396, %v1395
    // Predicated region
    $region26: #{mlrole_forward.1} parent=1 // pred_check
      _
    $region27: #{mlrole_forward.1} parent=1 // pred_check_branch
      %1399 = sbr.rel (0) target = $region29
    $region28: #{mlrole_forward.1} parent=1 // pred_region
      %s1401 = ssub.s32 64, 64
      %1402 = vsyncadd [#allocation4], %s1401
      %s1404 = sshll.u32 [#allocation5], 4
      %s1405 = int_to_ptr.vmem [resolvable:$true] %s1404
      %1407 = dma.vmem_to_hbm [thread:$0]  %s1405, 64, %s5, [#allocation4]
    $region29: #{mlrole_forward.1} parent=1 // pred_fallthru
      _
    // Predicated region
    $region30: #{mlrole_forward.1} parent=1 // pred_check
      _
    $region31: #{mlrole_forward.1} parent=1 // pred_check_branch
      %1409 = sbr.rel (0) target = $region33
    $region32: #{mlrole_forward.1} parent=1 // pred_region
      %1410 = dma.done [#allocation4], 64
    $region33: #{mlrole_forward.1} parent=1 // pred_fallthru
      _
    %1411 = vsyncpa [#allocation3], 1
    %1412 = vsyncpa [#allocation4], 1

</llo_original>
